<compile_context>
chip_gen: v7x
topology: tpu7x:2x2x1
jax: 0.10.0
libtpu: 0.0.40
codegen_flags: <defaults>
</compile_context>

<pallas_src>
import math
from functools import partial

import jax
import jax.numpy as jnp
import numpy as np
from jax.experimental import pallas as pl
from jax.experimental.pallas import tpu as pltpu

_EPS = 1e-5  # nn.LayerNorm default eps


# ----------------------------- in-kernel math -------------------------------
def _erf(x):
    # Abramowitz & Stegun 7.1.26 rational approximation (|err| < 1.5e-7),
    # i.e. erf exact to float32 precision -> exact (non-tanh) GELU semantics.
    a1, a2, a3, a4, a5 = 0.254829592, -0.284496736, 1.421413741, -1.453152027, 1.061405429
    p = 0.3275911
    s = jnp.where(x >= 0.0, 1.0, -1.0)
    ax = jnp.abs(x)
    t = 1.0 / (1.0 + p * ax)
    poly = ((((a5 * t + a4) * t + a3) * t + a2) * t + a1) * t
    return s * (1.0 - poly * jnp.exp(-ax * ax))


def _gelu_exact(x):
    return 0.5 * x * (1.0 + _erf(x * (1.0 / math.sqrt(2.0))))


def _layer_norm(x, w, b):
    mu = jnp.mean(x, axis=-1, keepdims=True)
    var = jnp.mean((x - mu) ** 2, axis=-1, keepdims=True)
    return (x - mu) * jax.lax.rsqrt(var + _EPS) * w + b


# ---------------------------- fused transformer kernel ----------------------
def _gpt_kernel(x_ref,
                ln1w_ref, ln1b_ref, wqkv_ref, bqkv_ref, wpo_ref, bpo_ref,
                ln2w_ref, ln2b_ref, wfc_ref, bfc_ref, wpr_ref, bpr_ref,
                lnfw_ref, lnfb_ref,
                o_ref, acc_ref, *, n_head):
    l = pl.program_id(1)
    n_layer = pl.num_programs(1)
    bf16 = jnp.bfloat16

    # Load the embedding block into the resident VMEM accumulator at layer 0.
    @pl.when(l == 0)
    def _():
        acc_ref[...] = x_ref[0]

    x = acc_ref[...]                           # (T, C) f32 residual stream
    T, C = x.shape
    hd = C // n_head
    scale = 1.0 / math.sqrt(hd)

    # ---- attention branch: x + c_proj(attn(LN1(x))) ----
    h = _layer_norm(x, ln1w_ref[0], ln1b_ref[0]).astype(bf16)
    qkv = jnp.dot(h, wqkv_ref[0], preferred_element_type=jnp.float32) + bqkv_ref[0]  # (T, 3C) f32
    qkv = qkv.astype(bf16)

    # Head-major layout (static-slice repack only; all math is batched below).
    q = jnp.stack([qkv[:, i * hd:(i + 1) * hd] for i in range(n_head)], axis=0)          # (nh,T,hd)
    k = jnp.stack([qkv[:, C + i * hd:C + (i + 1) * hd] for i in range(n_head)], axis=0)   # (nh,T,hd)
    v = jnp.stack([qkv[:, 2 * C + i * hd:2 * C + (i + 1) * hd] for i in range(n_head)], axis=0)

    s = jnp.einsum('hqd,hkd->hqk', q, k, preferred_element_type=jnp.float32) * scale      # (nh,T,T)
    s = s - jnp.max(s, axis=-1, keepdims=True)          # softmax (no causal mask)
    p = jnp.exp(s)
    p = p * pl.reciprocal(jnp.sum(p, axis=-1, keepdims=True), approx=True)
    y = jnp.einsum('hqk,hkd->hqd', p.astype(bf16), v, preferred_element_type=jnp.float32)  # (nh,T,hd)
    y = jnp.concatenate([y[i] for i in range(n_head)], axis=-1).astype(bf16)               # (T, C)
    att = jnp.dot(y, wpo_ref[0], preferred_element_type=jnp.float32) + bpo_ref[0]
    x = x + att                                           # dropout(p=0) == identity

    # ---- MLP branch: x + c_proj(gelu(c_fc(LN2(x)))) ----
    h2 = _layer_norm(x, ln2w_ref[0], ln2b_ref[0]).astype(bf16)
    f = jnp.dot(h2, wfc_ref[0], preferred_element_type=jnp.float32) + bfc_ref[0]          # (T, 4C)
    f = _gelu_exact(f).astype(bf16)
    mlp = jnp.dot(f, wpr_ref[0], preferred_element_type=jnp.float32) + bpr_ref[0]
    x = x + mlp

    acc_ref[...] = x

    # Final LayerNorm fused into the last layer step.
    @pl.when(l == n_layer - 1)
    def _():
        o_ref[0] = _layer_norm(x, lnfw_ref[...], lnfb_ref[...])


# ------------------------------ parameter setup ------------------------------
def _round_bf16(x):
    # Weights are consumed by the kernel in bf16; store bf16-representable f32
    # values so the f32 reference and the kernel see identical weights.
    return x.astype(jnp.bfloat16).astype(jnp.float32)


def init_params(key, cfg):
    C, V, BS, L = cfg["n_embd"], cfg["vocab_size"], cfg["block_size"], cfg["n_layer"]
    ks = jax.random.split(key, 2 + 6 * L)
    std = 0.02
    params = {
        "wte": std * jax.random.normal(ks[0], (V, C), jnp.float32),
        "wpe": std * jax.random.normal(ks[1], (BS, C), jnp.float32),
        "ln_f_w": jnp.ones((1, C), jnp.float32),
        "ln_f_b": jnp.zeros((1, C), jnp.float32),
        "blocks": [],
    }
    for l in range(L):
        k = ks[2 + 6 * l: 2 + 6 * (l + 1)]
        params["blocks"].append({
            "ln1_w": jnp.ones((1, C), jnp.float32),
            "ln1_b": jnp.zeros((1, C), jnp.float32),
            "w_qkv": _round_bf16(std * jax.random.normal(k[0], (C, 3 * C), jnp.float32)),
            "b_qkv": jnp.zeros((1, 3 * C), jnp.float32),
            "w_proj": _round_bf16(std * jax.random.normal(k[1], (C, C), jnp.float32)),
            "b_proj": jnp.zeros((1, C), jnp.float32),
            "ln2_w": jnp.ones((1, C), jnp.float32),
            "ln2_b": jnp.zeros((1, C), jnp.float32),
            "w_fc": _round_bf16(std * jax.random.normal(k[2], (C, 4 * C), jnp.float32)),
            "b_fc": jnp.zeros((1, 4 * C), jnp.float32),
            "w_fcproj": _round_bf16(std * jax.random.normal(k[3], (4 * C, C), jnp.float32)),
            "b_fcproj": jnp.zeros((1, C), jnp.float32),
        })
    return params


# -------------------------------- full forward --------------------------------
def transformer_forward(idx, params, cfg):
    B, T = idx.shape
    C, L, nh = cfg["n_embd"], cfg["n_layer"], cfg["n_head"]
    assert T <= cfg["block_size"]

    # Embedding gather + position add in plain JAX (data-dependent gather = glue).
    tok_emb = jnp.take(params["wte"], idx, axis=0)        # (B, T, C)
    pos_emb = params["wpe"][:T][None, :, :]               # (1, T, C)
    x = (tok_emb + pos_emb).astype(jnp.float32)

    blocks = params["blocks"]
    bf16, f32 = jnp.bfloat16, jnp.float32

    def stack(name, dtype):
        return jnp.stack([blk[name] for blk in blocks], axis=0).astype(dtype)

    # Per-layer params stacked on a leading layer axis; weights in bf16.
    stacked = [
        stack("ln1_w", f32), stack("ln1_b", f32),
        stack("w_qkv", bf16), stack("b_qkv", f32),
        stack("w_proj", bf16), stack("b_proj", f32),
        stack("ln2_w", f32), stack("ln2_b", f32),
        stack("w_fc", bf16), stack("b_fc", f32),
        stack("w_fcproj", bf16), stack("b_fcproj", f32),
    ]
    args = [x] + stacked + [params["ln_f_w"], params["ln_f_b"]]

    def layer_spec(a):
        return pl.BlockSpec((1,) + a.shape[1:], lambda b, l: (l, 0, 0))

    in_specs = [pl.BlockSpec((1, T, C), lambda b, l: (b, 0, 0))]      # x: resident per batch row
    in_specs += [layer_spec(a) for a in stacked]                       # stream one layer's params per step
    in_specs += [pl.BlockSpec((1, C), lambda b, l: (0, 0)),            # ln_f (fetched once)
                 pl.BlockSpec((1, C), lambda b, l: (0, 0))]

    # Advisory cost estimate.
    flops = B * L * (24 * T * C * C + 4 * T * T * C)
    transc = B * L * (nh * T * T + 4 * T * C)
    weight_bytes = sum(int(np.prod(a.shape)) * a.dtype.itemsize
                       for a in stacked + [params["ln_f_w"], params["ln_f_b"]])
    bytes_accessed = int(2 * x.size * 4 + B * weight_bytes)

    return pl.pallas_call(
        partial(_gpt_kernel, n_head=nh),
        grid_spec=pltpu.PrefetchScalarGridSpec(
            num_scalar_prefetch=0,
            grid=(B, L),
            in_specs=in_specs,
            out_specs=pl.BlockSpec((1, T, C), lambda b, l: (b, 0, 0)),
            scratch_shapes=[pltpu.VMEM((T, C), jnp.float32)],          # resident residual stream
        ),
        out_shape=jax.ShapeDtypeStruct((B, T, C), jnp.float32),
        compiler_params=pltpu.CompilerParams(
            dimension_semantics=("parallel", "arbitrary"),
            vmem_limit_bytes=64 * 1024 * 1024,
        ),
        cost_estimate=pl.CostEstimate(flops=int(flops), transcendentals=int(transc),
                                      bytes_accessed=bytes_accessed),
    )(*args)


# ------------------------------ pure-JAX reference ----------------------------
def _ref_forward(idx, params, cfg):
    C, nh = cfg["n_embd"], cfg["n_head"]
    hd = C // nh
    erf = jax.scipy.special.erf

    def ln(x, w, b):
        mu = x.mean(-1, keepdims=True)
        var = ((x - mu) ** 2).mean(-1, keepdims=True)
        return (x - mu) / jnp.sqrt(var + _EPS) * w + b

    B, T = idx.shape
    x = jnp.take(params["wte"], idx, axis=0) + params["wpe"][:T][None]
    for p in params["blocks"]:
        h = ln(x, p["ln1_w"], p["ln1_b"])
        qkv = h @ p["w_qkv"] + p["b_qkv"]
        q, k, v = jnp.split(qkv, 3, axis=-1)
        q = q.reshape(B, T, nh, hd).transpose(0, 2, 1, 3)
        k = k.reshape(B, T, nh, hd).transpose(0, 2, 1, 3)
        v = v.reshape(B, T, nh, hd).transpose(0, 2, 1, 3)
        s = jnp.einsum("bhqd,bhkd->bhqk", q, k) / math.sqrt(hd)
        a = jax.nn.softmax(s, axis=-1)
        y = jnp.einsum("bhqk,bhkd->bhqd", a, v).transpose(0, 2, 1, 3).reshape(B, T, C)
        x = x + (y @ p["w_proj"] + p["b_proj"])
        h2 = ln(x, p["ln2_w"], p["ln2_b"])
        f = h2 @ p["w_fc"] + p["b_fc"]
        f = 0.5 * f * (1.0 + erf(f / math.sqrt(2.0)))
        x = x + (f @ p["w_fcproj"] + p["b_fcproj"])
    return ln(x, params["ln_f_w"], params["ln_f_b"])


if __name__ == "__main__":
    cfg = dict(vocab_size=64, block_size=16, n_layer=2, n_head=4, n_embd=32, dropout=0.0)
    key = jax.random.PRNGKey(0)
    pkey, ikey = jax.random.split(key)
    params = init_params(pkey, cfg)

    B, T = 2, 8
    idx = jax.random.randint(ikey, (B, T), 0, cfg["vocab_size"], dtype=jnp.int32)

    out = jax.block_until_ready(transformer_forward(idx, params, cfg))
    assert out.shape == (B, T, cfg["n_embd"]) and out.dtype == jnp.float32

    ref = jax.block_until_ready(_ref_forward(idx, params, cfg))
    np.testing.assert_allclose(np.asarray(out), np.asarray(ref), rtol=2e-2, atol=2e-2)
    print("KERNEL_OK")
</pallas_src>

<mosaic_0001>
module attributes {stable_mosaic.version = 11 : i64} {
  func.func @_gpt_kernel(%arg0: i32, %arg1: i32, %arg2: memref<1x8x32xf32, #tpu.memory_space<vmem>>, %arg3: memref<1x1x32xf32, #tpu.memory_space<vmem>>, %arg4: memref<1x1x32xf32, #tpu.memory_space<vmem>>, %arg5: memref<1x32x96xbf16, #tpu.memory_space<vmem>>, %arg6: memref<1x1x96xf32, #tpu.memory_space<vmem>>, %arg7: memref<1x32x32xbf16, #tpu.memory_space<vmem>>, %arg8: memref<1x1x32xf32, #tpu.memory_space<vmem>>, %arg9: memref<1x1x32xf32, #tpu.memory_space<vmem>>, %arg10: memref<1x1x32xf32, #tpu.memory_space<vmem>>, %arg11: memref<1x32x128xbf16, #tpu.memory_space<vmem>>, %arg12: memref<1x1x128xf32, #tpu.memory_space<vmem>>, %arg13: memref<1x128x32xbf16, #tpu.memory_space<vmem>>, %arg14: memref<1x1x32xf32, #tpu.memory_space<vmem>>, %arg15: memref<1x32xf32, #tpu.memory_space<vmem>>, %arg16: memref<1x32xf32, #tpu.memory_space<vmem>>, %arg17: memref<1x8x32xf32, #tpu.memory_space<vmem>>, %arg18: memref<8x32xf32, #tpu.memory_space<vmem>>) attributes {dimension_semantics = [#tpu.dimension_semantics<parallel>, #tpu.dimension_semantics<arbitrary>], iteration_bounds = array<i64: 2, 2>, scalar_prefetch = 0 : i64, scratch_operands = 1 : i64, tpu.core_type = #tpu.core_type<tc>, window_params = [{transform_indices = @transform_0, window_bounds = array<i64: 1, 8, 32>}, {transform_indices = @transform_1, window_bounds = array<i64: 1, 1, 32>}, {transform_indices = @transform_2, window_bounds = array<i64: 1, 1, 32>}, {transform_indices = @transform_3, window_bounds = array<i64: 1, 32, 96>}, {transform_indices = @transform_4, window_bounds = array<i64: 1, 1, 96>}, {transform_indices = @transform_5, window_bounds = array<i64: 1, 32, 32>}, {transform_indices = @transform_6, window_bounds = array<i64: 1, 1, 32>}, {transform_indices = @transform_7, window_bounds = array<i64: 1, 1, 32>}, {transform_indices = @transform_8, window_bounds = array<i64: 1, 1, 32>}, {transform_indices = @transform_9, window_bounds = array<i64: 1, 32, 128>}, {transform_indices = @transform_10, window_bounds = array<i64: 1, 1, 128>}, {transform_indices = @transform_11, window_bounds = array<i64: 1, 128, 32>}, {transform_indices = @transform_12, window_bounds = array<i64: 1, 1, 32>}, {pipeline_mode = #tpu.pipeline_mode<synchronous>, transform_indices = @transform_13, window_bounds = array<i64: 1, 32>}, {pipeline_mode = #tpu.pipeline_mode<synchronous>, transform_indices = @transform_14, window_bounds = array<i64: 1, 32>}, {transform_indices = @transform_15, window_bounds = array<i64: 1, 8, 32>}]} {
    %c0_i32 = arith.constant 0 : i32
    %0 = arith.cmpi eq, %arg1, %c0_i32 : i32
    %1 = arith.extui %0 : i1 to i32
    %c0_i32_0 = arith.constant 0 : i32
    %2 = arith.cmpi ne, %1, %c0_i32_0 : i32
    scf.if %2 {
      %c0_75 = arith.constant 0 : index
      %c0_76 = arith.constant 0 : index
      %c0_77 = arith.constant 0 : index
      %187 = vector.load %arg2[%c0_75, %c0_76, %c0_77] : memref<1x8x32xf32, #tpu.memory_space<vmem>>, vector<1x8x32xf32>
      %188 = vector.shape_cast %187 : vector<1x8x32xf32> to vector<8x32xf32>
      %c0_78 = arith.constant 0 : index
      %c0_79 = arith.constant 0 : index
      %189 = vector.load %arg18[%c0_78, %c0_79] : memref<8x32xf32, #tpu.memory_space<vmem>>, vector<8x32xf32>
      tpu.vector_store %arg18[%c0_78, %c0_79], %188 {strides = array<i32>} : memref<8x32xf32, #tpu.memory_space<vmem>>, vector<8x32xf32>,
    } else {
    }
    %c0 = arith.constant 0 : index
    %c0_1 = arith.constant 0 : index
    %3 = vector.load %arg18[%c0, %c0_1] : memref<8x32xf32, #tpu.memory_space<vmem>>, vector<8x32xf32>
    %c0_2 = arith.constant 0 : index
    %c0_3 = arith.constant 0 : index
    %c0_4 = arith.constant 0 : index
    %4 = vector.load %arg3[%c0_2, %c0_3, %c0_4] : memref<1x1x32xf32, #tpu.memory_space<vmem>>, vector<1x1x32xf32>
    %5 = vector.shape_cast %4 : vector<1x1x32xf32> to vector<1x32xf32>
    %c0_5 = arith.constant 0 : index
    %c0_6 = arith.constant 0 : index
    %c0_7 = arith.constant 0 : index
    %6 = vector.load %arg4[%c0_5, %c0_6, %c0_7] : memref<1x1x32xf32, #tpu.memory_space<vmem>>, vector<1x1x32xf32>
    %7 = vector.shape_cast %6 : vector<1x1x32xf32> to vector<1x32xf32>
    %cst = arith.constant dense<0.000000e+00> : vector<8xf32>
    %8 = vector.multi_reduction <add>, %3, %cst [1] : vector<8x32xf32> to vector<8xf32>
    %9 = vector.shape_cast %8 : vector<8xf32> to vector<8x1xf32>
    %cst_8 = arith.constant 3.200000e+01 : f32
    %10 = vector.broadcast %cst_8 : f32 to vector<8x1xf32>
    %11 = arith.divf %9, %10 : vector<8x1xf32>
    %12 = vector.broadcast %11 : vector<8x1xf32> to vector<8x32xf32>
    %13 = arith.subf %3, %12 : vector<8x32xf32>
    %14 = arith.mulf %13, %13 : vector<8x32xf32>
    %cst_9 = arith.constant dense<0.000000e+00> : vector<8xf32>
    %15 = vector.multi_reduction <add>, %14, %cst_9 [1] : vector<8x32xf32> to vector<8xf32>
    %16 = vector.shape_cast %15 : vector<8xf32> to vector<8x1xf32>
    %cst_10 = arith.constant 3.200000e+01 : f32
    %17 = vector.broadcast %cst_10 : f32 to vector<8x1xf32>
    %18 = arith.divf %16, %17 : vector<8x1xf32>
    %19 = vector.broadcast %11 : vector<8x1xf32> to vector<8x32xf32>
    %20 = arith.subf %3, %19 : vector<8x32xf32>
    %cst_11 = arith.constant 9.99999974E-6 : f32
    %21 = vector.broadcast %cst_11 : f32 to vector<8x1xf32>
    %22 = arith.addf %18, %21 : vector<8x1xf32>
    %23 = math.rsqrt %22 : vector<8x1xf32>
    %24 = vector.broadcast %23 : vector<8x1xf32> to vector<8x32xf32>
    %25 = arith.mulf %20, %24 : vector<8x32xf32>
    %26 = vector.broadcast %5 : vector<1x32xf32> to vector<8x32xf32>
    %27 = arith.mulf %25, %26 : vector<8x32xf32>
    %28 = vector.broadcast %7 : vector<1x32xf32> to vector<8x32xf32>
    %29 = arith.addf %27, %28 : vector<8x32xf32>
    %30 = arith.truncf %29 : vector<8x32xf32> to vector<8x32xbf16>
    %c0_12 = arith.constant 0 : index
    %c0_13 = arith.constant 0 : index
    %c0_14 = arith.constant 0 : index
    %31 = vector.load %arg5[%c0_12, %c0_13, %c0_14] : memref<1x32x96xbf16, #tpu.memory_space<vmem>>, vector<1x32x96xbf16>
    %32 = vector.shape_cast %31 : vector<1x32x96xbf16> to vector<32x96xbf16>
    %cst_15 = arith.constant dense<0.000000e+00> : vector<8x96xf32>
    %33 = tpu.matmul %30, %32, %cst_15 {dimension_numbers = #tpu.dot_dimension_numbers<[1], [0], [0], [1], [0, 0, 1, 1], [], []>} : vector<8x32xbf16>, vector<32x96xbf16>, vector<8x96xf32> -> vector<8x96xf32>
    %c0_16 = arith.constant 0 : index
    %c0_17 = arith.constant 0 : index
    %c0_18 = arith.constant 0 : index
    %34 = vector.load %arg6[%c0_16, %c0_17, %c0_18] : memref<1x1x96xf32, #tpu.memory_space<vmem>>, vector<1x1x96xf32>
    %35 = vector.shape_cast %34 : vector<1x1x96xf32> to vector<1x96xf32>
    %36 = vector.broadcast %35 : vector<1x96xf32> to vector<8x96xf32>
    %37 = arith.addf %33, %36 : vector<8x96xf32>
    %38 = arith.truncf %37 : vector<8x96xf32> to vector<8x96xbf16>
    %39 = vector.extract_strided_slice %38 {offsets = [0, 0], sizes = [8, 8], strides = [1, 1]} : vector<8x96xbf16> to vector<8x8xbf16>
    %40 = vector.extract_strided_slice %38 {offsets = [0, 8], sizes = [8, 8], strides = [1, 1]} : vector<8x96xbf16> to vector<8x8xbf16>
    %41 = vector.extract_strided_slice %38 {offsets = [0, 16], sizes = [8, 8], strides = [1, 1]} : vector<8x96xbf16> to vector<8x8xbf16>
    %42 = vector.extract_strided_slice %38 {offsets = [0, 24], sizes = [8, 8], strides = [1, 1]} : vector<8x96xbf16> to vector<8x8xbf16>
    %43 = vector.shape_cast %39 : vector<8x8xbf16> to vector<1x8x8xbf16>
    %44 = vector.shape_cast %40 : vector<8x8xbf16> to vector<1x8x8xbf16>
    %45 = vector.shape_cast %41 : vector<8x8xbf16> to vector<1x8x8xbf16>
    %46 = vector.shape_cast %42 : vector<8x8xbf16> to vector<1x8x8xbf16>
    %47 = tpu.concatenate %43, %44, %45, %46 in 0 : vector<1x8x8xbf16>, vector<1x8x8xbf16>, vector<1x8x8xbf16>, vector<1x8x8xbf16> -> vector<4x8x8xbf16>
    %48 = vector.extract_strided_slice %38 {offsets = [0, 32], sizes = [8, 8], strides = [1, 1]} : vector<8x96xbf16> to vector<8x8xbf16>
    %49 = vector.extract_strided_slice %38 {offsets = [0, 40], sizes = [8, 8], strides = [1, 1]} : vector<8x96xbf16> to vector<8x8xbf16>
    %50 = vector.extract_strided_slice %38 {offsets = [0, 48], sizes = [8, 8], strides = [1, 1]} : vector<8x96xbf16> to vector<8x8xbf16>
    %51 = vector.extract_strided_slice %38 {offsets = [0, 56], sizes = [8, 8], strides = [1, 1]} : vector<8x96xbf16> to vector<8x8xbf16>
    %52 = vector.shape_cast %48 : vector<8x8xbf16> to vector<1x8x8xbf16>
    %53 = vector.shape_cast %49 : vector<8x8xbf16> to vector<1x8x8xbf16>
    %54 = vector.shape_cast %50 : vector<8x8xbf16> to vector<1x8x8xbf16>
    %55 = vector.shape_cast %51 : vector<8x8xbf16> to vector<1x8x8xbf16>
    %56 = tpu.concatenate %52, %53, %54, %55 in 0 : vector<1x8x8xbf16>, vector<1x8x8xbf16>, vector<1x8x8xbf16>, vector<1x8x8xbf16> -> vector<4x8x8xbf16>
    %57 = vector.extract_strided_slice %38 {offsets = [0, 64], sizes = [8, 8], strides = [1, 1]} : vector<8x96xbf16> to vector<8x8xbf16>
    %58 = vector.extract_strided_slice %38 {offsets = [0, 72], sizes = [8, 8], strides = [1, 1]} : vector<8x96xbf16> to vector<8x8xbf16>
    %59 = vector.extract_strided_slice %38 {offsets = [0, 80], sizes = [8, 8], strides = [1, 1]} : vector<8x96xbf16> to vector<8x8xbf16>
    %60 = vector.extract_strided_slice %38 {offsets = [0, 88], sizes = [8, 8], strides = [1, 1]} : vector<8x96xbf16> to vector<8x8xbf16>
    %61 = vector.shape_cast %57 : vector<8x8xbf16> to vector<1x8x8xbf16>
    %62 = vector.shape_cast %58 : vector<8x8xbf16> to vector<1x8x8xbf16>
    %63 = vector.shape_cast %59 : vector<8x8xbf16> to vector<1x8x8xbf16>
    %64 = vector.shape_cast %60 : vector<8x8xbf16> to vector<1x8x8xbf16>
    %65 = tpu.concatenate %61, %62, %63, %64 in 0 : vector<1x8x8xbf16>, vector<1x8x8xbf16>, vector<1x8x8xbf16>, vector<1x8x8xbf16> -> vector<4x8x8xbf16>
    "tpu.trace_start"() <{level = 10 : i32, message = "hqd,hkd->hqk"}> : () -> ()
    %cst_19 = arith.constant dense<0.000000e+00> : vector<4x8x8xf32>
    %66 = tpu.matmul %47, %56, %cst_19 {dimension_numbers = #tpu.dot_dimension_numbers<[2], [2], [1], [1], [0, 0, 0, 1, 1, 1], [0], [0]>} : vector<4x8x8xbf16>, vector<4x8x8xbf16>, vector<4x8x8xf32> -> vector<4x8x8xf32>
    "tpu.trace_stop"() : () -> ()
    %cst_20 = arith.constant 0.353553385 : f32
    %67 = vector.broadcast %cst_20 : f32 to vector<4x8x8xf32>
    %68 = arith.mulf %66, %67 : vector<4x8x8xf32>
    %cst_21 = arith.constant dense<0xFF800000> : vector<4x8xf32>
    %69 = vector.multi_reduction <maximumf>, %68, %cst_21 [2] : vector<4x8x8xf32> to vector<4x8xf32>
    %70 = vector.shape_cast %69 : vector<4x8xf32> to vector<4x8x1xf32>
    %71 = vector.broadcast %70 : vector<4x8x1xf32> to vector<4x8x8xf32>
    %72 = arith.subf %68, %71 : vector<4x8x8xf32>
    %73 = math.exp %72 : vector<4x8x8xf32>
    %cst_22 = arith.constant dense<0.000000e+00> : vector<4x8xf32>
    %74 = vector.multi_reduction <add>, %73, %cst_22 [2] : vector<4x8x8xf32> to vector<4x8xf32>
    %75 = vector.shape_cast %74 : vector<4x8xf32> to vector<4x8x1xf32>
    %76 = tpu.reciprocal %75 {approx = true} : vector<4x8x1xf32> -> vector<4x8x1xf32>
    %77 = vector.broadcast %76 : vector<4x8x1xf32> to vector<4x8x8xf32>
    %78 = arith.mulf %73, %77 : vector<4x8x8xf32>
    %79 = arith.truncf %78 : vector<4x8x8xf32> to vector<4x8x8xbf16>
    "tpu.trace_start"() <{level = 10 : i32, message = "hqk,hkd->hqd"}> : () -> ()
    %cst_23 = arith.constant dense<0.000000e+00> : vector<4x8x8xf32>
    %80 = tpu.matmul %79, %65, %cst_23 {dimension_numbers = #tpu.dot_dimension_numbers<[2], [1], [1], [2], [0, 0, 0, 1, 1, 2], [0], [0]>} : vector<4x8x8xbf16>, vector<4x8x8xbf16>, vector<4x8x8xf32> -> vector<4x8x8xf32>
    "tpu.trace_stop"() : () -> ()
    %81 = vector.extract_strided_slice %80 {offsets = [0, 0, 0], sizes = [1, 8, 8], strides = [1, 1, 1]} : vector<4x8x8xf32> to vector<1x8x8xf32>
    %82 = vector.shape_cast %81 : vector<1x8x8xf32> to vector<8x8xf32>
    %83 = vector.extract_strided_slice %80 {offsets = [1, 0, 0], sizes = [1, 8, 8], strides = [1, 1, 1]} : vector<4x8x8xf32> to vector<1x8x8xf32>
    %84 = vector.shape_cast %83 : vector<1x8x8xf32> to vector<8x8xf32>
    %85 = vector.extract_strided_slice %80 {offsets = [2, 0, 0], sizes = [1, 8, 8], strides = [1, 1, 1]} : vector<4x8x8xf32> to vector<1x8x8xf32>
    %86 = vector.shape_cast %85 : vector<1x8x8xf32> to vector<8x8xf32>
    %87 = vector.extract_strided_slice %80 {offsets = [3, 0, 0], sizes = [1, 8, 8], strides = [1, 1, 1]} : vector<4x8x8xf32> to vector<1x8x8xf32>
    %88 = vector.shape_cast %87 : vector<1x8x8xf32> to vector<8x8xf32>
    %89 = tpu.concatenate %82, %84, %86, %88 in 1 : vector<8x8xf32>, vector<8x8xf32>, vector<8x8xf32>, vector<8x8xf32> -> vector<8x32xf32>
    %90 = arith.truncf %89 : vector<8x32xf32> to vector<8x32xbf16>
    %c0_24 = arith.constant 0 : index
    %c0_25 = arith.constant 0 : index
    %c0_26 = arith.constant 0 : index
    %91 = vector.load %arg7[%c0_24, %c0_25, %c0_26] : memref<1x32x32xbf16, #tpu.memory_space<vmem>>, vector<1x32x32xbf16>
    %92 = vector.shape_cast %91 : vector<1x32x32xbf16> to vector<32x32xbf16>
    %cst_27 = arith.constant dense<0.000000e+00> : vector<8x32xf32>
    %93 = tpu.matmul %90, %92, %cst_27 {dimension_numbers = #tpu.dot_dimension_numbers<[1], [0], [0], [1], [0, 0, 1, 1], [], []>} : vector<8x32xbf16>, vector<32x32xbf16>, vector<8x32xf32> -> vector<8x32xf32>
    %c0_28 = arith.constant 0 : index
    %c0_29 = arith.constant 0 : index
    %c0_30 = arith.constant 0 : index
    %94 = vector.load %arg8[%c0_28, %c0_29, %c0_30] : memref<1x1x32xf32, #tpu.memory_space<vmem>>, vector<1x1x32xf32>
    %95 = vector.shape_cast %94 : vector<1x1x32xf32> to vector<1x32xf32>
    %96 = vector.broadcast %95 : vector<1x32xf32> to vector<8x32xf32>
    %97 = arith.addf %93, %96 : vector<8x32xf32>
    %98 = arith.addf %3, %97 : vector<8x32xf32>
    %c0_31 = arith.constant 0 : index
    %c0_32 = arith.constant 0 : index
    %c0_33 = arith.constant 0 : index
    %99 = vector.load %arg9[%c0_31, %c0_32, %c0_33] : memref<1x1x32xf32, #tpu.memory_space<vmem>>, vector<1x1x32xf32>
    %100 = vector.shape_cast %99 : vector<1x1x32xf32> to vector<1x32xf32>
    %c0_34 = arith.constant 0 : index
    %c0_35 = arith.constant 0 : index
    %c0_36 = arith.constant 0 : index
    %101 = vector.load %arg10[%c0_34, %c0_35, %c0_36] : memref<1x1x32xf32, #tpu.memory_space<vmem>>, vector<1x1x32xf32>
    %102 = vector.shape_cast %101 : vector<1x1x32xf32> to vector<1x32xf32>
    %cst_37 = arith.constant dense<0.000000e+00> : vector<8xf32>
    %103 = vector.multi_reduction <add>, %98, %cst_37 [1] : vector<8x32xf32> to vector<8xf32>
    %104 = vector.shape_cast %103 : vector<8xf32> to vector<8x1xf32>
    %cst_38 = arith.constant 3.200000e+01 : f32
    %105 = vector.broadcast %cst_38 : f32 to vector<8x1xf32>
    %106 = arith.divf %104, %105 : vector<8x1xf32>
    %107 = vector.broadcast %106 : vector<8x1xf32> to vector<8x32xf32>
    %108 = arith.subf %98, %107 : vector<8x32xf32>
    %109 = arith.mulf %108, %108 : vector<8x32xf32>
    %cst_39 = arith.constant dense<0.000000e+00> : vector<8xf32>
    %110 = vector.multi_reduction <add>, %109, %cst_39 [1] : vector<8x32xf32> to vector<8xf32>
    %111 = vector.shape_cast %110 : vector<8xf32> to vector<8x1xf32>
    %cst_40 = arith.constant 3.200000e+01 : f32
    %112 = vector.broadcast %cst_40 : f32 to vector<8x1xf32>
    %113 = arith.divf %111, %112 : vector<8x1xf32>
    %114 = vector.broadcast %106 : vector<8x1xf32> to vector<8x32xf32>
    %115 = arith.subf %98, %114 : vector<8x32xf32>
    %cst_41 = arith.constant 9.99999974E-6 : f32
    %116 = vector.broadcast %cst_41 : f32 to vector<8x1xf32>
    %117 = arith.addf %113, %116 : vector<8x1xf32>
    %118 = math.rsqrt %117 : vector<8x1xf32>
    %119 = vector.broadcast %118 : vector<8x1xf32> to vector<8x32xf32>
    %120 = arith.mulf %115, %119 : vector<8x32xf32>
    %121 = vector.broadcast %100 : vector<1x32xf32> to vector<8x32xf32>
    %122 = arith.mulf %120, %121 : vector<8x32xf32>
    %123 = vector.broadcast %102 : vector<1x32xf32> to vector<8x32xf32>
    %124 = arith.addf %122, %123 : vector<8x32xf32>
    %125 = arith.truncf %124 : vector<8x32xf32> to vector<8x32xbf16>
    %c0_42 = arith.constant 0 : index
    %c0_43 = arith.constant 0 : index
    %c0_44 = arith.constant 0 : index
    %126 = vector.load %arg11[%c0_42, %c0_43, %c0_44] : memref<1x32x128xbf16, #tpu.memory_space<vmem>>, vector<1x32x128xbf16>
    %127 = vector.shape_cast %126 : vector<1x32x128xbf16> to vector<32x128xbf16>
    %cst_45 = arith.constant dense<0.000000e+00> : vector<8x128xf32>
    %128 = tpu.matmul %125, %127, %cst_45 {dimension_numbers = #tpu.dot_dimension_numbers<[1], [0], [0], [1], [0, 0, 1, 1], [], []>} : vector<8x32xbf16>, vector<32x128xbf16>, vector<8x128xf32> -> vector<8x128xf32>
    %c0_46 = arith.constant 0 : index
    %c0_47 = arith.constant 0 : index
    %c0_48 = arith.constant 0 : index
    %129 = vector.load %arg12[%c0_46, %c0_47, %c0_48] : memref<1x1x128xf32, #tpu.memory_space<vmem>>, vector<1x1x128xf32>
    %130 = vector.shape_cast %129 : vector<1x1x128xf32> to vector<1x128xf32>
    %131 = vector.broadcast %130 : vector<1x128xf32> to vector<8x128xf32>
    %132 = arith.addf %128, %131 : vector<8x128xf32>
    %cst_49 = arith.constant 5.000000e-01 : f32
    %133 = vector.broadcast %cst_49 : f32 to vector<8x128xf32>
    %134 = arith.mulf %133, %132 : vector<8x128xf32>
    %cst_50 = arith.constant 0.707106769 : f32
    %135 = vector.broadcast %cst_50 : f32 to vector<8x128xf32>
    %136 = arith.mulf %132, %135 : vector<8x128xf32>
    %cst_51 = arith.constant 0.000000e+00 : f32
    %137 = vector.broadcast %cst_51 : f32 to vector<8x128xf32>
    %138 = arith.cmpf oge, %136, %137 : vector<8x128xf32>
    %cst_52 = arith.constant 1.000000e+00 : f32
    %cst_53 = arith.constant -1.000000e+00 : f32
    %139 = vector.broadcast %cst_52 : f32 to vector<8x128xf32>
    %140 = vector.broadcast %cst_53 : f32 to vector<8x128xf32>
    %141 = arith.select %138, %139, %140 : vector<8x128xi1>, vector<8x128xf32>
    %142 = math.absf %136 : vector<8x128xf32>
    %cst_54 = arith.constant 0.327591091 : f32
    %143 = vector.broadcast %cst_54 : f32 to vector<8x128xf32>
    %144 = arith.mulf %143, %142 : vector<8x128xf32>
    %cst_55 = arith.constant 1.000000e+00 : f32
    %145 = vector.broadcast %cst_55 : f32 to vector<8x128xf32>
    %146 = arith.addf %145, %144 : vector<8x128xf32>
    %cst_56 = arith.constant 1.000000e+00 : f32
    %147 = vector.broadcast %cst_56 : f32 to vector<8x128xf32>
    %148 = arith.divf %147, %146 : vector<8x128xf32>
    %cst_57 = arith.constant 1.06140542 : f32
    %149 = vector.broadcast %cst_57 : f32 to vector<8x128xf32>
    %150 = arith.mulf %149, %148 : vector<8x128xf32>
    %cst_58 = arith.constant -1.45315206 : f32
    %151 = vector.broadcast %cst_58 : f32 to vector<8x128xf32>
    %152 = arith.addf %150, %151 : vector<8x128xf32>
    %153 = arith.mulf %152, %148 : vector<8x128xf32>
    %cst_59 = arith.constant 1.42141378 : f32
    %154 = vector.broadcast %cst_59 : f32 to vector<8x128xf32>
    %155 = arith.addf %153, %154 : vector<8x128xf32>
    %156 = arith.mulf %155, %148 : vector<8x128xf32>
    %cst_60 = arith.constant -0.284496725 : f32
    %157 = vector.broadcast %cst_60 : f32 to vector<8x128xf32>
    %158 = arith.addf %156, %157 : vector<8x128xf32>
    %159 = arith.mulf %158, %148 : vector<8x128xf32>
    %cst_61 = arith.constant 0.254829586 : f32
    %160 = vector.broadcast %cst_61 : f32 to vector<8x128xf32>
    %161 = arith.addf %159, %160 : vector<8x128xf32>
    %162 = arith.mulf %161, %148 : vector<8x128xf32>
    %cst_62 = arith.constant 0.000000e+00 : f32
    %163 = vector.broadcast %cst_62 : f32 to vector<8x128xf32>
    %164 = arith.subf %163, %142 : vector<8x128xf32>
    %165 = arith.mulf %164, %142 : vector<8x128xf32>
    %166 = math.exp %165 : vector<8x128xf32>
    %167 = arith.mulf %162, %166 : vector<8x128xf32>
    %cst_63 = arith.constant 1.000000e+00 : f32
    %168 = vector.broadcast %cst_63 : f32 to vector<8x128xf32>
    %169 = arith.subf %168, %167 : vector<8x128xf32>
    %170 = arith.mulf %141, %169 : vector<8x128xf32>
    %cst_64 = arith.constant 1.000000e+00 : f32
    %171 = vector.broadcast %cst_64 : f32 to vector<8x128xf32>
    %172 = arith.addf %171, %170 : vector<8x128xf32>
    %173 = arith.mulf %134, %172 : vector<8x128xf32>
    %174 = arith.truncf %173 : vector<8x128xf32> to vector<8x128xbf16>
    %c0_65 = arith.constant 0 : index
    %c0_66 = arith.constant 0 : index
    %c0_67 = arith.constant 0 : index
    %175 = vector.load %arg13[%c0_65, %c0_66, %c0_67] : memref<1x128x32xbf16, #tpu.memory_space<vmem>>, vector<1x128x32xbf16>
    %176 = vector.shape_cast %175 : vector<1x128x32xbf16> to vector<128x32xbf16>
    %cst_68 = arith.constant dense<0.000000e+00> : vector<8x32xf32>
    %177 = tpu.matmul %174, %176, %cst_68 {dimension_numbers = #tpu.dot_dimension_numbers<[1], [0], [0], [1], [0, 0, 1, 1], [], []>} : vector<8x128xbf16>, vector<128x32xbf16>, vector<8x32xf32> -> vector<8x32xf32>
    %c0_69 = arith.constant 0 : index
    %c0_70 = arith.constant 0 : index
    %c0_71 = arith.constant 0 : index
    %178 = vector.load %arg14[%c0_69, %c0_70, %c0_71] : memref<1x1x32xf32, #tpu.memory_space<vmem>>, vector<1x1x32xf32>
    %179 = vector.shape_cast %178 : vector<1x1x32xf32> to vector<1x32xf32>
    %180 = vector.broadcast %179 : vector<1x32xf32> to vector<8x32xf32>
    %181 = arith.addf %177, %180 : vector<8x32xf32>
    %182 = arith.addf %98, %181 : vector<8x32xf32>
    %c0_72 = arith.constant 0 : index
    %c0_73 = arith.constant 0 : index
    %183 = vector.load %arg18[%c0_72, %c0_73] : memref<8x32xf32, #tpu.memory_space<vmem>>, vector<8x32xf32>
    tpu.vector_store %arg18[%c0_72, %c0_73], %182 {strides = array<i32>} : memref<8x32xf32, #tpu.memory_space<vmem>>, vector<8x32xf32>,
    %c1_i32 = arith.constant 1 : i32
    %184 = arith.cmpi eq, %arg1, %c1_i32 : i32
    %185 = arith.extui %184 : i1 to i32
    %c0_i32_74 = arith.constant 0 : i32
    %186 = arith.cmpi ne, %185, %c0_i32_74 : i32
    scf.if %186 {
      %c0_75 = arith.constant 0 : index
      %c0_76 = arith.constant 0 : index
      %187 = vector.load %arg15[%c0_75, %c0_76] : memref<1x32xf32, #tpu.memory_space<vmem>>, vector<1x32xf32>
      %c0_77 = arith.constant 0 : index
      %c0_78 = arith.constant 0 : index
      %188 = vector.load %arg16[%c0_77, %c0_78] : memref<1x32xf32, #tpu.memory_space<vmem>>, vector<1x32xf32>
      %cst_79 = arith.constant dense<0.000000e+00> : vector<8xf32>
      %189 = vector.multi_reduction <add>, %182, %cst_79 [1] : vector<8x32xf32> to vector<8xf32>
      %190 = vector.shape_cast %189 : vector<8xf32> to vector<8x1xf32>
      %cst_80 = arith.constant 3.200000e+01 : f32
      %191 = vector.broadcast %cst_80 : f32 to vector<8x1xf32>
      %192 = arith.divf %190, %191 : vector<8x1xf32>
      %193 = vector.broadcast %192 : vector<8x1xf32> to vector<8x32xf32>
      %194 = arith.subf %182, %193 : vector<8x32xf32>
      %195 = arith.mulf %194, %194 : vector<8x32xf32>
      %cst_81 = arith.constant dense<0.000000e+00> : vector<8xf32>
      %196 = vector.multi_reduction <add>, %195, %cst_81 [1] : vector<8x32xf32> to vector<8xf32>
      %197 = vector.shape_cast %196 : vector<8xf32> to vector<8x1xf32>
      %cst_82 = arith.constant 3.200000e+01 : f32
      %198 = vector.broadcast %cst_82 : f32 to vector<8x1xf32>
      %199 = arith.divf %197, %198 : vector<8x1xf32>
      %200 = vector.broadcast %192 : vector<8x1xf32> to vector<8x32xf32>
      %201 = arith.subf %182, %200 : vector<8x32xf32>
      %cst_83 = arith.constant 9.99999974E-6 : f32
      %202 = vector.broadcast %cst_83 : f32 to vector<8x1xf32>
      %203 = arith.addf %199, %202 : vector<8x1xf32>
      %204 = math.rsqrt %203 : vector<8x1xf32>
      %205 = vector.broadcast %204 : vector<8x1xf32> to vector<8x32xf32>
      %206 = arith.mulf %201, %205 : vector<8x32xf32>
      %207 = vector.broadcast %187 : vector<1x32xf32> to vector<8x32xf32>
      %208 = arith.mulf %206, %207 : vector<8x32xf32>
      %209 = vector.broadcast %188 : vector<1x32xf32> to vector<8x32xf32>
      %210 = arith.addf %208, %209 : vector<8x32xf32>
      %c0_84 = arith.constant 0 : index
      %c0_85 = arith.constant 0 : index
      %c0_86 = arith.constant 0 : index
      %211 = vector.load %arg17[%c0_84, %c0_85, %c0_86] : memref<1x8x32xf32, #tpu.memory_space<vmem>>, vector<1x8x32xf32>
      %212 = vector.shape_cast %211 : vector<1x8x32xf32> to vector<8x32xf32>
      %213 = vector.shape_cast %210 : vector<8x32xf32> to vector<1x8x32xf32>
      tpu.vector_store %arg17[%c0_84, %c0_85, %c0_86], %213 {strides = array<i32>} : memref<1x8x32xf32, #tpu.memory_space<vmem>>, vector<1x8x32xf32>,
    } else {
    }
    return
  }
  func.func @transform_0(%arg0: i32, %arg1: i32) -> (i32, i32, i32) {
    %c0_i32 = arith.constant 0 : i32
    %c0_i32_0 = arith.constant 0 : i32
    %c0_i32_1 = arith.constant 0 : i32
    return %arg0, %c0_i32, %c0_i32_0 : i32, i32, i32
  }
  func.func @transform_1(%arg0: i32, %arg1: i32) -> (i32, i32, i32) {
    %c0_i32 = arith.constant 0 : i32
    %c0_i32_0 = arith.constant 0 : i32
    %c0_i32_1 = arith.constant 0 : i32
    return %arg1, %c0_i32, %c0_i32_0 : i32, i32, i32
  }
  func.func @transform_2(%arg0: i32, %arg1: i32) -> (i32, i32, i32) {
    %c0_i32 = arith.constant 0 : i32
    %c0_i32_0 = arith.constant 0 : i32
    %c0_i32_1 = arith.constant 0 : i32
    return %arg1, %c0_i32, %c0_i32_0 : i32, i32, i32
  }
  func.func @transform_3(%arg0: i32, %arg1: i32) -> (i32, i32, i32) {
    %c0_i32 = arith.constant 0 : i32
    %c0_i32_0 = arith.constant 0 : i32
    %c0_i32_1 = arith.constant 0 : i32
    return %arg1, %c0_i32, %c0_i32_0 : i32, i32, i32
  }
  func.func @transform_4(%arg0: i32, %arg1: i32) -> (i32, i32, i32) {
    %c0_i32 = arith.constant 0 : i32
    %c0_i32_0 = arith.constant 0 : i32
    %c0_i32_1 = arith.constant 0 : i32
    return %arg1, %c0_i32, %c0_i32_0 : i32, i32, i32
  }
  func.func @transform_5(%arg0: i32, %arg1: i32) -> (i32, i32, i32) {
    %c0_i32 = arith.constant 0 : i32
    %c0_i32_0 = arith.constant 0 : i32
    %c0_i32_1 = arith.constant 0 : i32
    return %arg1, %c0_i32, %c0_i32_0 : i32, i32, i32
  }
  func.func @transform_6(%arg0: i32, %arg1: i32) -> (i32, i32, i32) {
    %c0_i32 = arith.constant 0 : i32
    %c0_i32_0 = arith.constant 0 : i32
    %c0_i32_1 = arith.constant 0 : i32
    return %arg1, %c0_i32, %c0_i32_0 : i32, i32, i32
  }
  func.func @transform_7(%arg0: i32, %arg1: i32) -> (i32, i32, i32) {
    %c0_i32 = arith.constant 0 : i32
    %c0_i32_0 = arith.constant 0 : i32
    %c0_i32_1 = arith.constant 0 : i32
    return %arg1, %c0_i32, %c0_i32_0 : i32, i32, i32
  }
  func.func @transform_8(%arg0: i32, %arg1: i32) -> (i32, i32, i32) {
    %c0_i32 = arith.constant 0 : i32
    %c0_i32_0 = arith.constant 0 : i32
    %c0_i32_1 = arith.constant 0 : i32
    return %arg1, %c0_i32, %c0_i32_0 : i32, i32, i32
  }
  func.func @transform_9(%arg0: i32, %arg1: i32) -> (i32, i32, i32) {
    %c0_i32 = arith.constant 0 : i32
    %c0_i32_0 = arith.constant 0 : i32
    %c0_i32_1 = arith.constant 0 : i32
    return %arg1, %c0_i32, %c0_i32_0 : i32, i32, i32
  }
  func.func @transform_10(%arg0: i32, %arg1: i32) -> (i32, i32, i32) {
    %c0_i32 = arith.constant 0 : i32
    %c0_i32_0 = arith.constant 0 : i32
    %c0_i32_1 = arith.constant 0 : i32
    return %arg1, %c0_i32, %c0_i32_0 : i32, i32, i32
  }
  func.func @transform_11(%arg0: i32, %arg1: i32) -> (i32, i32, i32) {
    %c0_i32 = arith.constant 0 : i32
    %c0_i32_0 = arith.constant 0 : i32
    %c0_i32_1 = arith.constant 0 : i32
    return %arg1, %c0_i32, %c0_i32_0 : i32, i32, i32
  }
  func.func @transform_12(%arg0: i32, %arg1: i32) -> (i32, i32, i32) {
    %c0_i32 = arith.constant 0 : i32
    %c0_i32_0 = arith.constant 0 : i32
    %c0_i32_1 = arith.constant 0 : i32
    return %arg1, %c0_i32, %c0_i32_0 : i32, i32, i32
  }
  func.func @transform_13(%arg0: i32, %arg1: i32) -> (i32, i32) {
    %c0_i32 = arith.constant 0 : i32
    %c0_i32_0 = arith.constant 0 : i32
    %c0_i32_1 = arith.constant 0 : i32
    return %c0_i32, %c0_i32_0 : i32, i32
  }
  func.func @transform_14(%arg0: i32, %arg1: i32) -> (i32, i32) {
    %c0_i32 = arith.constant 0 : i32
    %c0_i32_0 = arith.constant 0 : i32
    %c0_i32_1 = arith.constant 0 : i32
    return %c0_i32, %c0_i32_0 : i32, i32
  }
  func.func @transform_15(%arg0: i32, %arg1: i32) -> (i32, i32, i32) {
    %c0_i32 = arith.constant 0 : i32
    %c0_i32_0 = arith.constant 0 : i32
    %c0_i32_1 = arith.constant 0 : i32
    return %arg0, %c0_i32, %c0_i32_0 : i32, i32, i32
  }
}

</mosaic_0001>

<llo_original>
// kernel: tpu_custom_call.1
$region0: #{tpu_custom_call.1}
  #allocation0 [shape = 'u32[]', space=smem, size = 0x4, offset = 0x4, fixed_abs, tag = 'smem constant byte address 0x4 - core index']
  #allocation1 [shape = 'u32[144,128]{1,0:T(1,128)}', space=vmem, size = 0x12000, scoped, tag = 'internal scratch']
  #allocation2 [shape = 'f32[8,32]{1,0:T(8,128)}', space=vmem, size = 0x1000, scoped, tag = 'scratch operand']
  %s0 = inlined_call_operand.hbm [shape: f32[2,8,32], index: 0, kind: input, shape index: {}]
  %s1 = inlined_call_operand.hbm [shape: f32[2,1,32], index: 1, kind: input, shape index: {}]
  %s2 = inlined_call_operand.hbm [shape: f32[2,1,32], index: 2, kind: input, shape index: {}]
  %s3 = inlined_call_operand.hbm [shape: bf16[2,32,96], index: 3, kind: input, shape index: {}]
  %s4 = inlined_call_operand.hbm [shape: f32[2,1,96], index: 4, kind: input, shape index: {}]
  %s5 = inlined_call_operand.hbm [shape: bf16[2,32,32], index: 5, kind: input, shape index: {}]
  %s6 = inlined_call_operand.hbm [shape: f32[2,1,32], index: 6, kind: input, shape index: {}]
  %s7 = inlined_call_operand.hbm [shape: f32[2,1,32], index: 7, kind: input, shape index: {}]
  %s8 = inlined_call_operand.hbm [shape: f32[2,1,32], index: 8, kind: input, shape index: {}]
  %s9 = inlined_call_operand.hbm [shape: bf16[2,32,128], index: 9, kind: input, shape index: {}]
  %s10 = inlined_call_operand.hbm [shape: f32[2,1,128], index: 10, kind: input, shape index: {}]
  %s11 = inlined_call_operand.hbm [shape: bf16[2,128,32], index: 11, kind: input, shape index: {}]
  %s12 = inlined_call_operand.hbm [shape: f32[2,1,32], index: 12, kind: input, shape index: {}]
  %s13 = inlined_call_operand.hbm [shape: f32[1,32], index: 13, kind: input, shape index: {}]
  %s14 = inlined_call_operand.hbm [shape: f32[1,32], index: 14, kind: input, shape index: {}]
  %s15 = inlined_call_operand.hbm [shape: f32[2,8,32], index: 15, kind: output, shape index: {}]
  %s16 = sld [smem:[#allocation0]]
  $region161: #{tpu_custom_call.1} parent=0
    _
  %s18 = ssub.s32 1, %s16
  %s19 = scalar_select 0, %s18, %s16
  $region1: #{tpu_custom_call.1} parent=0
    #allocation3 [shape = 'u8[8192]{0}', space=vmem, size = 0x2000, scoped, tag = 'input window, operand 0']
    #allocation4 [shape = 's32[2]{0}', space=sflag, size = 0x8, scoped, tag = 'scoped memory for tpu_custom_call.1']
    #allocation5 [shape = 's32[2]{0}', space=sflag, size = 0x8, scoped, tag = 'scoped memory for tpu_custom_call.1']
    #allocation6 [shape = 'u8[1024]{0}', space=vmem, size = 0x400, scoped, tag = 'input window, operand 1']
    #allocation7 [shape = 's32[2]{0}', space=sflag, size = 0x8, scoped, tag = 'scoped memory for tpu_custom_call.1']
    #allocation8 [shape = 'u8[1024]{0}', space=vmem, size = 0x400, scoped, tag = 'input window, operand 2']
    #allocation9 [shape = 'u8[16384]{0}', space=vmem, size = 0x4000, scoped, tag = 'input window, operand 3']
    #allocation10 [shape = 's32[2]{0}', space=sflag, size = 0x8, scoped, tag = 'scoped memory for tpu_custom_call.1']
    #allocation11 [shape = 'u8[1024]{0}', space=vmem, size = 0x400, scoped, tag = 'input window, operand 4']
    #allocation12 [shape = 'u8[16384]{0}', space=vmem, size = 0x4000, scoped, tag = 'input window, operand 5']
    #allocation13 [shape = 's32[2]{0}', space=sflag, size = 0x8, scoped, tag = 'scoped memory for tpu_custom_call.1']
    #allocation14 [shape = 'u8[1024]{0}', space=vmem, size = 0x400, scoped, tag = 'input window, operand 6']
    #allocation15 [shape = 'u8[1024]{0}', space=vmem, size = 0x400, scoped, tag = 'input window, operand 7']
    #allocation16 [shape = 's32[2]{0}', space=sflag, size = 0x8, scoped, tag = 'scoped memory for tpu_custom_call.1']
    #allocation17 [shape = 'u8[1024]{0}', space=vmem, size = 0x400, scoped, tag = 'input window, operand 8']
    #allocation18 [shape = 'u8[16384]{0}', space=vmem, size = 0x4000, scoped, tag = 'input window, operand 9']
    #allocation19 [shape = 's32[2]{0}', space=sflag, size = 0x8, scoped, tag = 'scoped memory for tpu_custom_call.1']
    #allocation20 [shape = 'u8[1024]{0}', space=vmem, size = 0x400, scoped, tag = 'input window, operand 10']
    #allocation21 [shape = 'u8[65536]{0}', space=vmem, size = 0x10000, scoped, tag = 'input window, operand 11']
    #allocation22 [shape = 's32[2]{0}', space=sflag, size = 0x8, scoped, tag = 'scoped memory for tpu_custom_call.1']
    #allocation23 [shape = 'u8[1024]{0}', space=vmem, size = 0x400, scoped, tag = 'input window, operand 12']
    #allocation24 [shape = 'u8[512]{0}', space=vmem, size = 0x400, scoped, tag = 'input window, operand 13, single buffered']
    #allocation25 [shape = 's32[1]{0}', space=sflag, size = 0x4, scoped, tag = 'scoped memory for tpu_custom_call.1']
    #allocation26 [shape = 'u8[512]{0}', space=vmem, size = 0x400, scoped, tag = 'input window, operand 14, single buffered']
    #allocation27 [shape = 'u8[8192]{0}', space=vmem, size = 0x2000, scoped, tag = 'output window, operand 0']
    %20 = vsyncpa [#allocation4], 0
    %s21 = scalar_lea.sflag [#allocation4], 1
    %22 = vsyncpa %s21, 0
    %23 = vsyncpa [#allocation7], 0
    %s24 = scalar_lea.sflag [#allocation7], 1
    %25 = vsyncpa %s24, 0
    %26 = vsyncpa [#allocation10], 0
    %s27 = scalar_lea.sflag [#allocation10], 1
    %28 = vsyncpa %s27, 0
    %29 = vsyncpa [#allocation13], 0
    %s30 = scalar_lea.sflag [#allocation13], 1
    %31 = vsyncpa %s30, 0
    %32 = vsyncpa [#allocation16], 0
    %s33 = scalar_lea.sflag [#allocation16], 1
    %34 = vsyncpa %s33, 0
    %35 = vsyncpa [#allocation19], 0
    %s36 = scalar_lea.sflag [#allocation19], 1
    %37 = vsyncpa %s36, 0
    %38 = vsyncpa [#allocation22], 0
    %s39 = scalar_lea.sflag [#allocation22], 1
    %40 = vsyncpa %s39, 0
    %41 = vsyncpa [#allocation25], 0
    %42 = vsyncpa [#allocation5], 0
    %s43 = scalar_lea.sflag [#allocation5], 1
    %44 = vsyncpa %s43, 0
    loop: start=0, step=1, limit=6
    $region2: #{tpu_custom_call.1} parent=1 // loop_pre_header
      _
    $region3: #{tpu_custom_call.1} parent=1 // loop_header
      %s46 = sphi 0, %s50
      %p47 = scmp.ge.s32.totalorder %s46, 6
      %s53 = sphi 0, %s65
      %s54 = sphi 0, %s61
      %s55 = sphi 0, %s53
      %s56 = sphi 0, %s54
      %s57 = sphi 0, %s55
      %s58 = sphi 0, %s56
      %s68 = sphi 0, %s70
      %s71 = sphi 0, %s68
      %s72 = sphi 0, %s71
      %s88 = sphi 0, %s72
      %s94 = sphi 0, %s96
      %s97 = sphi 0, %s94
      %s98 = sphi 0, %s97
      %s114 = sphi 0, %s98
      %s120 = sphi 0, %s122
      %s123 = sphi 0, %s120
      %s124 = sphi 0, %s123
      %s140 = sphi 0, %s124
      %s146 = sphi 0, %s148
      %s149 = sphi 0, %s146
      %s150 = sphi 0, %s149
      %s166 = sphi 0, %s150
      %s172 = sphi 0, %s174
      %s175 = sphi 0, %s172
      %s176 = sphi 0, %s175
      %s192 = sphi 0, %s176
      %s198 = sphi 0, %s200
      %s201 = sphi 0, %s198
      %s202 = sphi 0, %s201
      %s218 = sphi 0, %s202
      %s224 = sphi 0, %s226
      %s227 = sphi 0, %s224
      %s228 = sphi 0, %s227
      %s244 = sphi 0, %s228
      %s250 = sphi 0, %s252
      %s253 = sphi 0, %s250
      %s254 = sphi 0, %s253
      %s270 = sphi 0, %s254
      %s276 = sphi 0, %s278
      %s279 = sphi 0, %s276
      %s280 = sphi 0, %s279
      %s296 = sphi 0, %s280
      %s302 = sphi 0, %s304
      %s305 = sphi 0, %s302
      %s306 = sphi 0, %s305
      %s322 = sphi 0, %s306
      %s328 = sphi 0, %s330
      %s331 = sphi 0, %s328
      %s332 = sphi 0, %s331
      %s348 = sphi 0, %s332
      %s354 = sphi 0, %s356
      %s357 = sphi 0, %s354
      %s358 = sphi 0, %s357
      %s374 = sphi 0, %s358
      %s380 = sphi 0, %s382
      %s383 = sphi 0, %s380
      %s384 = sphi 0, %s383
      %s400 = sphi 0, %s384
      %s404 = sphi 0, %s404
      %s406 = sphi 0, %s404
      %s407 = sphi 0, %s406
      %s421 = sphi 0, %s407
      %s425 = sphi 0, %s425
      %s427 = sphi 0, %s425
      %s428 = sphi 0, %s427
      %s442 = sphi 0, %s428
      %s448 = sphi 0, %s450
      %s451 = sphi 0, %s448
      %s452 = sphi 0, %s451
      %s468 = sphi 0, %s452
    $region4: #{tpu_custom_call.1} parent=1 // loop_header_branch
      %49 = sbr.rel (%p47) target = $region8
    $region5: #{tpu_custom_call.1} parent=1 // loop_body
      %s51 = ssub.s32 %s46, 1
      %s52 = ssub.s32 %s46, 2
      %s59 = sadd.s32 1, %s54
      %p60 = scmp.ge.s32.totalorder %s59, 2
      %s61 = scalar_select %p60, 0, %s59
      %s62 = sadd.s32 1, %s53
      %s63 = scalar_select %p60, %s62, %s53
      %p64 = scmp.ge.s32.totalorder %s63, 2
      %s65 = scalar_select %p64, 0, %s63
      %s66 = ssub.s32 %s53, %s65
      %p67 = scmp.eq.s32.totalorder %s66, 0
      %s69 = sadd.s32 %s68, 1
      %s70 = scalar_select %p67, %s68, %s69
      %p73 = pneg %p67
      %p74 = scmp.eq.s32.totalorder %s46, 3
      %p75 = por %p73, %p74
      %p76 = scmp.ne.s32.totalorder %s68, %s71
      %p77 = scmp.eq.s32.totalorder %s46, 0
      %p78 = por %p76, %p77
      %p79 = scmp.ne.s32.totalorder %s68, %s71
      %p80 = scmp.eq.s32.totalorder %s51, 3
      %p81 = por %p79, %p80
      %p82 = scmp.ne.s32.totalorder %s71, %s72
      %p83 = scmp.eq.s32.totalorder %s51, 0
      %p84 = por %p82, %p83
      %p85 = scmp.ne.s32.totalorder %s71, %s72
      %p86 = scmp.eq.s32.totalorder %s52, 3
      %p87 = por %p85, %p86
      %p89 = scmp.ne.s32.totalorder %s72, %s88
      %p90 = scmp.eq.s32.totalorder %s52, 0
      %p91 = por %p89, %p90
      %s92 = ssub.s32 %s54, %s61
      %p93 = scmp.eq.s32.totalorder %s92, 0
      %s95 = sadd.s32 %s94, 1
      %s96 = scalar_select %p93, %s94, %s95
      %p99 = pneg %p93
      %p100 = scmp.eq.s32.totalorder %s46, 3
      %p101 = por %p99, %p100
      %p102 = scmp.ne.s32.totalorder %s94, %s97
      %p103 = scmp.eq.s32.totalorder %s46, 0
      %p104 = por %p102, %p103
      %p105 = scmp.ne.s32.totalorder %s94, %s97
      %p106 = scmp.eq.s32.totalorder %s51, 3
      %p107 = por %p105, %p106
      %p108 = scmp.ne.s32.totalorder %s97, %s98
      %p109 = scmp.eq.s32.totalorder %s51, 0
      %p110 = por %p108, %p109
      %p111 = scmp.ne.s32.totalorder %s97, %s98
      %p112 = scmp.eq.s32.totalorder %s52, 3
      %p113 = por %p111, %p112
      %p115 = scmp.ne.s32.totalorder %s98, %s114
      %p116 = scmp.eq.s32.totalorder %s52, 0
      %p117 = por %p115, %p116
      %s118 = ssub.s32 %s54, %s61
      %p119 = scmp.eq.s32.totalorder %s118, 0
      %s121 = sadd.s32 %s120, 1
      %s122 = scalar_select %p119, %s120, %s121
      %p125 = pneg %p119
      %p126 = scmp.eq.s32.totalorder %s46, 3
      %p127 = por %p125, %p126
      %p128 = scmp.ne.s32.totalorder %s120, %s123
      %p129 = scmp.eq.s32.totalorder %s46, 0
      %p130 = por %p128, %p129
      %p131 = scmp.ne.s32.totalorder %s120, %s123
      %p132 = scmp.eq.s32.totalorder %s51, 3
      %p133 = por %p131, %p132
      %p134 = scmp.ne.s32.totalorder %s123, %s124
      %p135 = scmp.eq.s32.totalorder %s51, 0
      %p136 = por %p134, %p135
      %p137 = scmp.ne.s32.totalorder %s123, %s124
      %p138 = scmp.eq.s32.totalorder %s52, 3
      %p139 = por %p137, %p138
      %p141 = scmp.ne.s32.totalorder %s124, %s140
      %p142 = scmp.eq.s32.totalorder %s52, 0
      %p143 = por %p141, %p142
      %s144 = ssub.s32 %s54, %s61
      %p145 = scmp.eq.s32.totalorder %s144, 0
      %s147 = sadd.s32 %s146, 1
      %s148 = scalar_select %p145, %s146, %s147
      %p151 = pneg %p145
      %p152 = scmp.eq.s32.totalorder %s46, 3
      %p153 = por %p151, %p152
      %p154 = scmp.ne.s32.totalorder %s146, %s149
      %p155 = scmp.eq.s32.totalorder %s46, 0
      %p156 = por %p154, %p155
      %p157 = scmp.ne.s32.totalorder %s146, %s149
      %p158 = scmp.eq.s32.totalorder %s51, 3
      %p159 = por %p157, %p158
      %p160 = scmp.ne.s32.totalorder %s149, %s150
      %p161 = scmp.eq.s32.totalorder %s51, 0
      %p162 = por %p160, %p161
      %p163 = scmp.ne.s32.totalorder %s149, %s150
      %p164 = scmp.eq.s32.totalorder %s52, 3
      %p165 = por %p163, %p164
      %p167 = scmp.ne.s32.totalorder %s150, %s166
      %p168 = scmp.eq.s32.totalorder %s52, 0
      %p169 = por %p167, %p168
      %s170 = ssub.s32 %s54, %s61
      %p171 = scmp.eq.s32.totalorder %s170, 0
      %s173 = sadd.s32 %s172, 1
      %s174 = scalar_select %p171, %s172, %s173
      %p177 = pneg %p171
      %p178 = scmp.eq.s32.totalorder %s46, 3
      %p179 = por %p177, %p178
      %p180 = scmp.ne.s32.totalorder %s172, %s175
      %p181 = scmp.eq.s32.totalorder %s46, 0
      %p182 = por %p180, %p181
      %p183 = scmp.ne.s32.totalorder %s172, %s175
      %p184 = scmp.eq.s32.totalorder %s51, 3
      %p185 = por %p183, %p184
      %p186 = scmp.ne.s32.totalorder %s175, %s176
      %p187 = scmp.eq.s32.totalorder %s51, 0
      %p188 = por %p186, %p187
      %p189 = scmp.ne.s32.totalorder %s175, %s176
      %p190 = scmp.eq.s32.totalorder %s52, 3
      %p191 = por %p189, %p190
      %p193 = scmp.ne.s32.totalorder %s176, %s192
      %p194 = scmp.eq.s32.totalorder %s52, 0
      %p195 = por %p193, %p194
      %s196 = ssub.s32 %s54, %s61
      %p197 = scmp.eq.s32.totalorder %s196, 0
      %s199 = sadd.s32 %s198, 1
      %s200 = scalar_select %p197, %s198, %s199
      %p203 = pneg %p197
      %p204 = scmp.eq.s32.totalorder %s46, 3
      %p205 = por %p203, %p204
      %p206 = scmp.ne.s32.totalorder %s198, %s201
      %p207 = scmp.eq.s32.totalorder %s46, 0
      %p208 = por %p206, %p207
      %p209 = scmp.ne.s32.totalorder %s198, %s201
      %p210 = scmp.eq.s32.totalorder %s51, 3
      %p211 = por %p209, %p210
      %p212 = scmp.ne.s32.totalorder %s201, %s202
      %p213 = scmp.eq.s32.totalorder %s51, 0
      %p214 = por %p212, %p213
      %p215 = scmp.ne.s32.totalorder %s201, %s202
      %p216 = scmp.eq.s32.totalorder %s52, 3
      %p217 = por %p215, %p216
      %p219 = scmp.ne.s32.totalorder %s202, %s218
      %p220 = scmp.eq.s32.totalorder %s52, 0
      %p221 = por %p219, %p220
      %s222 = ssub.s32 %s54, %s61
      %p223 = scmp.eq.s32.totalorder %s222, 0
      %s225 = sadd.s32 %s224, 1
      %s226 = scalar_select %p223, %s224, %s225
      %p229 = pneg %p223
      %p230 = scmp.eq.s32.totalorder %s46, 3
      %p231 = por %p229, %p230
      %p232 = scmp.ne.s32.totalorder %s224, %s227
      %p233 = scmp.eq.s32.totalorder %s46, 0
      %p234 = por %p232, %p233
      %p235 = scmp.ne.s32.totalorder %s224, %s227
      %p236 = scmp.eq.s32.totalorder %s51, 3
      %p237 = por %p235, %p236
      %p238 = scmp.ne.s32.totalorder %s227, %s228
      %p239 = scmp.eq.s32.totalorder %s51, 0
      %p240 = por %p238, %p239
      %p241 = scmp.ne.s32.totalorder %s227, %s228
      %p242 = scmp.eq.s32.totalorder %s52, 3
      %p243 = por %p241, %p242
      %p245 = scmp.ne.s32.totalorder %s228, %s244
      %p246 = scmp.eq.s32.totalorder %s52, 0
      %p247 = por %p245, %p246
      %s248 = ssub.s32 %s54, %s61
      %p249 = scmp.eq.s32.totalorder %s248, 0
      %s251 = sadd.s32 %s250, 1
      %s252 = scalar_select %p249, %s250, %s251
      %p255 = pneg %p249
      %p256 = scmp.eq.s32.totalorder %s46, 3
      %p257 = por %p255, %p256
      %p258 = scmp.ne.s32.totalorder %s250, %s253
      %p259 = scmp.eq.s32.totalorder %s46, 0
      %p260 = por %p258, %p259
      %p261 = scmp.ne.s32.totalorder %s250, %s253
      %p262 = scmp.eq.s32.totalorder %s51, 3
      %p263 = por %p261, %p262
      %p264 = scmp.ne.s32.totalorder %s253, %s254
      %p265 = scmp.eq.s32.totalorder %s51, 0
      %p266 = por %p264, %p265
      %p267 = scmp.ne.s32.totalorder %s253, %s254
      %p268 = scmp.eq.s32.totalorder %s52, 3
      %p269 = por %p267, %p268
      %p271 = scmp.ne.s32.totalorder %s254, %s270
      %p272 = scmp.eq.s32.totalorder %s52, 0
      %p273 = por %p271, %p272
      %s274 = ssub.s32 %s54, %s61
      %p275 = scmp.eq.s32.totalorder %s274, 0
      %s277 = sadd.s32 %s276, 1
      %s278 = scalar_select %p275, %s276, %s277
      %p281 = pneg %p275
      %p282 = scmp.eq.s32.totalorder %s46, 3
      %p283 = por %p281, %p282
      %p284 = scmp.ne.s32.totalorder %s276, %s279
      %p285 = scmp.eq.s32.totalorder %s46, 0
      %p286 = por %p284, %p285
      %p287 = scmp.ne.s32.totalorder %s276, %s279
      %p288 = scmp.eq.s32.totalorder %s51, 3
      %p289 = por %p287, %p288
      %p290 = scmp.ne.s32.totalorder %s279, %s280
      %p291 = scmp.eq.s32.totalorder %s51, 0
      %p292 = por %p290, %p291
      %p293 = scmp.ne.s32.totalorder %s279, %s280
      %p294 = scmp.eq.s32.totalorder %s52, 3
      %p295 = por %p293, %p294
      %p297 = scmp.ne.s32.totalorder %s280, %s296
      %p298 = scmp.eq.s32.totalorder %s52, 0
      %p299 = por %p297, %p298
      %s300 = ssub.s32 %s54, %s61
      %p301 = scmp.eq.s32.totalorder %s300, 0
      %s303 = sadd.s32 %s302, 1
      %s304 = scalar_select %p301, %s302, %s303
      %p307 = pneg %p301
      %p308 = scmp.eq.s32.totalorder %s46, 3
      %p309 = por %p307, %p308
      %p310 = scmp.ne.s32.totalorder %s302, %s305
      %p311 = scmp.eq.s32.totalorder %s46, 0
      %p312 = por %p310, %p311
      %p313 = scmp.ne.s32.totalorder %s302, %s305
      %p314 = scmp.eq.s32.totalorder %s51, 3
      %p315 = por %p313, %p314
      %p316 = scmp.ne.s32.totalorder %s305, %s306
      %p317 = scmp.eq.s32.totalorder %s51, 0
      %p318 = por %p316, %p317
      %p319 = scmp.ne.s32.totalorder %s305, %s306
      %p320 = scmp.eq.s32.totalorder %s52, 3
      %p321 = por %p319, %p320
      %p323 = scmp.ne.s32.totalorder %s306, %s322
      %p324 = scmp.eq.s32.totalorder %s52, 0
      %p325 = por %p323, %p324
      %s326 = ssub.s32 %s54, %s61
      %p327 = scmp.eq.s32.totalorder %s326, 0
      %s329 = sadd.s32 %s328, 1
      %s330 = scalar_select %p327, %s328, %s329
      %p333 = pneg %p327
      %p334 = scmp.eq.s32.totalorder %s46, 3
      %p335 = por %p333, %p334
      %p336 = scmp.ne.s32.totalorder %s328, %s331
      %p337 = scmp.eq.s32.totalorder %s46, 0
      %p338 = por %p336, %p337
      %p339 = scmp.ne.s32.totalorder %s328, %s331
      %p340 = scmp.eq.s32.totalorder %s51, 3
      %p341 = por %p339, %p340
      %p342 = scmp.ne.s32.totalorder %s331, %s332
      %p343 = scmp.eq.s32.totalorder %s51, 0
      %p344 = por %p342, %p343
      %p345 = scmp.ne.s32.totalorder %s331, %s332
      %p346 = scmp.eq.s32.totalorder %s52, 3
      %p347 = por %p345, %p346
      %p349 = scmp.ne.s32.totalorder %s332, %s348
      %p350 = scmp.eq.s32.totalorder %s52, 0
      %p351 = por %p349, %p350
      %s352 = ssub.s32 %s54, %s61
      %p353 = scmp.eq.s32.totalorder %s352, 0
      %s355 = sadd.s32 %s354, 1
      %s356 = scalar_select %p353, %s354, %s355
      %p359 = pneg %p353
      %p360 = scmp.eq.s32.totalorder %s46, 3
      %p361 = por %p359, %p360
      %p362 = scmp.ne.s32.totalorder %s354, %s357
      %p363 = scmp.eq.s32.totalorder %s46, 0
      %p364 = por %p362, %p363
      %p365 = scmp.ne.s32.totalorder %s354, %s357
      %p366 = scmp.eq.s32.totalorder %s51, 3
      %p367 = por %p365, %p366
      %p368 = scmp.ne.s32.totalorder %s357, %s358
      %p369 = scmp.eq.s32.totalorder %s51, 0
      %p370 = por %p368, %p369
      %p371 = scmp.ne.s32.totalorder %s357, %s358
      %p372 = scmp.eq.s32.totalorder %s52, 3
      %p373 = por %p371, %p372
      %p375 = scmp.ne.s32.totalorder %s358, %s374
      %p376 = scmp.eq.s32.totalorder %s52, 0
      %p377 = por %p375, %p376
      %s378 = ssub.s32 %s54, %s61
      %p379 = scmp.eq.s32.totalorder %s378, 0
      %s381 = sadd.s32 %s380, 1
      %s382 = scalar_select %p379, %s380, %s381
      %p385 = pneg %p379
      %p386 = scmp.eq.s32.totalorder %s46, 3
      %p387 = por %p385, %p386
      %p388 = scmp.ne.s32.totalorder %s380, %s383
      %p389 = scmp.eq.s32.totalorder %s46, 0
      %p390 = por %p388, %p389
      %p391 = scmp.ne.s32.totalorder %s380, %s383
      %p392 = scmp.eq.s32.totalorder %s51, 3
      %p393 = por %p391, %p392
      %p394 = scmp.ne.s32.totalorder %s383, %s384
      %p395 = scmp.eq.s32.totalorder %s51, 0
      %p396 = por %p394, %p395
      %p397 = scmp.ne.s32.totalorder %s383, %s384
      %p398 = scmp.eq.s32.totalorder %s52, 3
      %p399 = por %p397, %p398
      %p401 = scmp.ne.s32.totalorder %s384, %s400
      %p402 = scmp.eq.s32.totalorder %s52, 0
      %p403 = por %p401, %p402
      %s405 = sadd.s32 %s404, 1
      %p408 = scmp.eq.s32.totalorder %s46, 3
      %p409 = scmp.ne.s32.totalorder %s404, %s406
      %p410 = scmp.eq.s32.totalorder %s46, 0
      %p411 = por %p409, %p410
      %p412 = scmp.ne.s32.totalorder %s404, %s406
      %p413 = scmp.eq.s32.totalorder %s51, 3
      %p414 = por %p412, %p413
      %p415 = scmp.ne.s32.totalorder %s406, %s407
      %p416 = scmp.eq.s32.totalorder %s51, 0
      %p417 = por %p415, %p416
      %p418 = scmp.ne.s32.totalorder %s406, %s407
      %p419 = scmp.eq.s32.totalorder %s52, 3
      %p420 = por %p418, %p419
      %p422 = scmp.ne.s32.totalorder %s407, %s421
      %p423 = scmp.eq.s32.totalorder %s52, 0
      %p424 = por %p422, %p423
      %s426 = sadd.s32 %s425, 1
      %p429 = scmp.eq.s32.totalorder %s46, 3
      %p430 = scmp.ne.s32.totalorder %s425, %s427
      %p431 = scmp.eq.s32.totalorder %s46, 0
      %p432 = por %p430, %p431
      %p433 = scmp.ne.s32.totalorder %s425, %s427
      %p434 = scmp.eq.s32.totalorder %s51, 3
      %p435 = por %p433, %p434
      %p436 = scmp.ne.s32.totalorder %s427, %s428
      %p437 = scmp.eq.s32.totalorder %s51, 0
      %p438 = por %p436, %p437
      %p439 = scmp.ne.s32.totalorder %s427, %s428
      %p440 = scmp.eq.s32.totalorder %s52, 3
      %p441 = por %p439, %p440
      %p443 = scmp.ne.s32.totalorder %s428, %s442
      %p444 = scmp.eq.s32.totalorder %s52, 0
      %p445 = por %p443, %p444
      %s446 = ssub.s32 %s53, %s65
      %p447 = scmp.eq.s32.totalorder %s446, 0
      %s449 = sadd.s32 %s448, 1
      %s450 = scalar_select %p447, %s448, %s449
      %p453 = pneg %p447
      %p454 = scmp.eq.s32.totalorder %s46, 3
      %p455 = por %p453, %p454
      %p456 = scmp.ne.s32.totalorder %s448, %s451
      %p457 = scmp.eq.s32.totalorder %s46, 0
      %p458 = por %p456, %p457
      %p459 = scmp.ne.s32.totalorder %s448, %s451
      %p460 = scmp.eq.s32.totalorder %s51, 3
      %p461 = por %p459, %p460
      %p462 = scmp.ne.s32.totalorder %s451, %s452
      %p463 = scmp.eq.s32.totalorder %s51, 0
      %p464 = por %p462, %p463
      %p465 = scmp.ne.s32.totalorder %s451, %s452
      %p466 = scmp.eq.s32.totalorder %s52, 3
      %p467 = por %p465, %p466
      %p469 = scmp.ne.s32.totalorder %s452, %s468
      %p470 = scmp.eq.s32.totalorder %s52, 0
      %p471 = por %p469, %p470
      %p472 = scmp.le.s32.totalorder 1, %s46
      %p473 = scmp.lt.s32.totalorder %s46, 5
      %p474 = pnand %p472, %p473
      %p475 = pneg %p474
      // Predicated region
      $region9: #{tpu_custom_call.1} parent=5 // pred_check
        _
      $region10: #{tpu_custom_call.1} parent=5 // pred_check_branch
        %477 = sbr.rel (%p474) target = $region12
      $region11: #{tpu_custom_call.1} parent=5 // pred_region
        %s478 = ssub.s32 %s46, 1
        // Predicated region
        $region13: #{tpu_custom_call.1} parent=11 // pred_check
          %p479 = pneg %p417
        $region14: #{tpu_custom_call.1} parent=11 // pred_check_branch
          %481 = sbr.rel (%p479) target = $region16
        $region15: #{tpu_custom_call.1} parent=11 // pred_region
          %s483 = ssub.s32 16, 16
          %484 = vsyncadd [#allocation25], %s483
          %s486 = sshll.u32 [#allocation24], 4
          %s487 = int_to_ptr.vmem [resolvable:$true] %s486
          %489 = dma.hbm_to_vmem [thread:$0]  %s13, 16, %s487, [#allocation25]
        $region16: #{tpu_custom_call.1} parent=11 // pred_fallthru
          _
        // Predicated region
        $region17: #{tpu_custom_call.1} parent=11 // pred_check
          %p490 = pneg %p438
        $region18: #{tpu_custom_call.1} parent=11 // pred_check_branch
          %492 = sbr.rel (%p490) target = $region20
        $region19: #{tpu_custom_call.1} parent=11 // pred_region
          %s494 = ssub.s32 16, 16
          %495 = vsyncadd [#allocation25], %s494
          %s497 = sshll.u32 [#allocation26], 4
          %s498 = int_to_ptr.vmem [resolvable:$true] %s497
          %500 = dma.hbm_to_vmem [thread:$0]  %s14, 16, %s498, [#allocation25]
        $region20: #{tpu_custom_call.1} parent=11 // pred_fallthru
          _
      $region12: #{tpu_custom_call.1} parent=5 // pred_fallthru
        _
      %p501 = scmp.lt.s32.totalorder %s46, 4
      // Predicated region
      $region21: #{tpu_custom_call.1} parent=5 // pred_check
        %p502 = pneg %p501
      $region22: #{tpu_custom_call.1} parent=5 // pred_check_branch
        %504 = sbr.rel (%p502) target = $region24
      $region23: #{tpu_custom_call.1} parent=5 // pred_region
        // Predicated region
        $region25: #{tpu_custom_call.1} parent=23 // pred_check
          %p505 = pneg %p78
        $region26: #{tpu_custom_call.1} parent=23 // pred_check_branch
          %507 = sbr.rel (%p505) target = $region28
        $region27: #{tpu_custom_call.1} parent=23 // pred_region
          %s508 = sand.u32 %s68, 1
          %s509 = scalar_lea.sflag [#allocation4], %s508
          %s510 = sand.u32 %s68, 1
          %s511 = smul.addr %s510, 8
          %s512 = scalar_lea.vmem [#allocation3], %s511
          %s514 = ssub.s32 128, 128
          %515 = vsyncadd %s509, %s514
          %s516 = smul.addr %s53, 128
          %s517 = scalar_lea.hbm %s0, %s516
          %s519 = sshll.u32 %s512, 4
          %s520 = int_to_ptr.vmem [resolvable:$true] %s519
          %522 = dma.hbm_to_vmem [thread:$0]  %s517, 128, %s520, %s509
        $region28: #{tpu_custom_call.1} parent=23 // pred_fallthru
          _
        // Predicated region
        $region29: #{tpu_custom_call.1} parent=23 // pred_check
          %p523 = pneg %p104
        $region30: #{tpu_custom_call.1} parent=23 // pred_check_branch
          %525 = sbr.rel (%p523) target = $region32
        $region31: #{tpu_custom_call.1} parent=23 // pred_region
          %s526 = sand.u32 %s46, 1
          %s527 = scalar_lea.sflag [#allocation7], %s526
          %s528 = sand.u32 %s94, 1
          %s529 = scalar_lea.vmem [#allocation6], %s528
          %s531 = ssub.s32 16, 16
          %532 = vsyncadd %s527, %s531
          %s533 = smul.addr %s54, 16
          %s534 = scalar_lea.hbm %s1, %s533
          %s536 = sshll.u32 %s529, 4
          %s537 = int_to_ptr.vmem [resolvable:$true] %s536
          %539 = dma.hbm_to_vmem [thread:$0]  %s534, 16, %s537, %s527
        $region32: #{tpu_custom_call.1} parent=23 // pred_fallthru
          _
        // Predicated region
        $region33: #{tpu_custom_call.1} parent=23 // pred_check
          %p540 = pneg %p130
        $region34: #{tpu_custom_call.1} parent=23 // pred_check_branch
          %542 = sbr.rel (%p540) target = $region36
        $region35: #{tpu_custom_call.1} parent=23 // pred_region
          %s543 = sand.u32 %s46, 1
          %s544 = scalar_lea.sflag [#allocation7], %s543
          %s545 = sand.u32 %s120, 1
          %s546 = scalar_lea.vmem [#allocation8], %s545
          %s548 = ssub.s32 16, 16
          %549 = vsyncadd %s544, %s548
          %s550 = smul.addr %s54, 16
          %s551 = scalar_lea.hbm %s2, %s550
          %s553 = sshll.u32 %s546, 4
          %s554 = int_to_ptr.vmem [resolvable:$true] %s553
          %556 = dma.hbm_to_vmem [thread:$0]  %s551, 16, %s554, %s544
        $region36: #{tpu_custom_call.1} parent=23 // pred_fallthru
          _
        // Predicated region
        $region37: #{tpu_custom_call.1} parent=23 // pred_check
          %p557 = pneg %p156
        $region38: #{tpu_custom_call.1} parent=23 // pred_check_branch
          %559 = sbr.rel (%p557) target = $region40
        $region39: #{tpu_custom_call.1} parent=23 // pred_region
          %s560 = sand.u32 %s46, 1
          %s561 = scalar_lea.sflag [#allocation10], %s560
          %s562 = sand.u32 %s146, 1
          %s563 = smul.addr %s562, 16
          %s564 = scalar_lea.vmem [#allocation9], %s563
          %s566 = ssub.s32 256, 256
          %567 = vsyncadd %s561, %s566
          %s568 = smul.addr %s54, 4
          %s569 = smul.addr %s568, 64
          %s570 = scalar_lea.hbm %s3, %s569
          %s571 = sshll.u32 %s564, 4
          %s572 = int_to_ptr.vmem [resolvable:$true] %s571
          %577 = dma.hbm_to_vmem [thread:$0]  %s570, 256, %s572, %s561, 64, 64, 4
        $region40: #{tpu_custom_call.1} parent=23 // pred_fallthru
          _
        // Predicated region
        $region41: #{tpu_custom_call.1} parent=23 // pred_check
          %p578 = pneg %p182
        $region42: #{tpu_custom_call.1} parent=23 // pred_check_branch
          %580 = sbr.rel (%p578) target = $region44
        $region43: #{tpu_custom_call.1} parent=23 // pred_region
          %s581 = sand.u32 %s46, 1
          %s582 = scalar_lea.sflag [#allocation10], %s581
          %s583 = sand.u32 %s172, 1
          %s584 = scalar_lea.vmem [#allocation11], %s583
          %s586 = ssub.s32 16, 16
          %587 = vsyncadd %s582, %s586
          %s588 = smul.addr %s54, 16
          %s589 = scalar_lea.hbm %s4, %s588
          %s591 = sshll.u32 %s584, 4
          %s592 = int_to_ptr.vmem [resolvable:$true] %s591
          %594 = dma.hbm_to_vmem [thread:$0]  %s589, 16, %s592, %s582
        $region44: #{tpu_custom_call.1} parent=23 // pred_fallthru
          _
        // Predicated region
        $region45: #{tpu_custom_call.1} parent=23 // pred_check
          %p595 = pneg %p208
        $region46: #{tpu_custom_call.1} parent=23 // pred_check_branch
          %597 = sbr.rel (%p595) target = $region48
        $region47: #{tpu_custom_call.1} parent=23 // pred_region
          %s598 = sand.u32 %s46, 1
          %s599 = scalar_lea.sflag [#allocation13], %s598
          %s600 = sand.u32 %s198, 1
          %s601 = smul.addr %s600, 16
          %s602 = scalar_lea.vmem [#allocation12], %s601
          %s604 = ssub.s32 256, 256
          %605 = vsyncadd %s599, %s604
          %s606 = smul.addr %s54, 4
          %s607 = smul.addr %s606, 64
          %s608 = scalar_lea.hbm %s5, %s607
          %s609 = sshll.u32 %s602, 4
          %s610 = int_to_ptr.vmem [resolvable:$true] %s609
          %615 = dma.hbm_to_vmem [thread:$0]  %s608, 256, %s610, %s599, 64, 64, 4
        $region48: #{tpu_custom_call.1} parent=23 // pred_fallthru
          _
        // Predicated region
        $region49: #{tpu_custom_call.1} parent=23 // pred_check
          %p616 = pneg %p234
        $region50: #{tpu_custom_call.1} parent=23 // pred_check_branch
          %618 = sbr.rel (%p616) target = $region52
        $region51: #{tpu_custom_call.1} parent=23 // pred_region
          %s619 = sand.u32 %s46, 1
          %s620 = scalar_lea.sflag [#allocation13], %s619
          %s621 = sand.u32 %s224, 1
          %s622 = scalar_lea.vmem [#allocation14], %s621
          %s624 = ssub.s32 16, 16
          %625 = vsyncadd %s620, %s624
          %s626 = smul.addr %s54, 16
          %s627 = scalar_lea.hbm %s6, %s626
          %s629 = sshll.u32 %s622, 4
          %s630 = int_to_ptr.vmem [resolvable:$true] %s629
          %632 = dma.hbm_to_vmem [thread:$0]  %s627, 16, %s630, %s620
        $region52: #{tpu_custom_call.1} parent=23 // pred_fallthru
          _
        // Predicated region
        $region53: #{tpu_custom_call.1} parent=23 // pred_check
          %p633 = pneg %p260
        $region54: #{tpu_custom_call.1} parent=23 // pred_check_branch
          %635 = sbr.rel (%p633) target = $region56
        $region55: #{tpu_custom_call.1} parent=23 // pred_region
          %s636 = sand.u32 %s46, 1
          %s637 = scalar_lea.sflag [#allocation16], %s636
          %s638 = sand.u32 %s250, 1
          %s639 = scalar_lea.vmem [#allocation15], %s638
          %s641 = ssub.s32 16, 16
          %642 = vsyncadd %s637, %s641
          %s643 = smul.addr %s54, 16
          %s644 = scalar_lea.hbm %s7, %s643
          %s646 = sshll.u32 %s639, 4
          %s647 = int_to_ptr.vmem [resolvable:$true] %s646
          %649 = dma.hbm_to_vmem [thread:$0]  %s644, 16, %s647, %s637
        $region56: #{tpu_custom_call.1} parent=23 // pred_fallthru
          _
        // Predicated region
        $region57: #{tpu_custom_call.1} parent=23 // pred_check
          %p650 = pneg %p286
        $region58: #{tpu_custom_call.1} parent=23 // pred_check_branch
          %652 = sbr.rel (%p650) target = $region60
        $region59: #{tpu_custom_call.1} parent=23 // pred_region
          %s653 = sand.u32 %s46, 1
          %s654 = scalar_lea.sflag [#allocation16], %s653
          %s655 = sand.u32 %s276, 1
          %s656 = scalar_lea.vmem [#allocation17], %s655
          %s658 = ssub.s32 16, 16
          %659 = vsyncadd %s654, %s658
          %s660 = smul.addr %s54, 16
          %s661 = scalar_lea.hbm %s8, %s660
          %s663 = sshll.u32 %s656, 4
          %s664 = int_to_ptr.vmem [resolvable:$true] %s663
          %666 = dma.hbm_to_vmem [thread:$0]  %s661, 16, %s664, %s654
        $region60: #{tpu_custom_call.1} parent=23 // pred_fallthru
          _
        // Predicated region
        $region61: #{tpu_custom_call.1} parent=23 // pred_check
          %p667 = pneg %p312
        $region62: #{tpu_custom_call.1} parent=23 // pred_check_branch
          %669 = sbr.rel (%p667) target = $region64
        $region63: #{tpu_custom_call.1} parent=23 // pred_region
          %s670 = sand.u32 %s46, 1
          %s671 = scalar_lea.sflag [#allocation19], %s670
          %s672 = sand.u32 %s302, 1
          %s673 = smul.addr %s672, 16
          %s674 = scalar_lea.vmem [#allocation18], %s673
          %s676 = ssub.s32 256, 256
          %677 = vsyncadd %s671, %s676
          %s678 = smul.addr %s54, 4
          %s679 = smul.addr %s678, 64
          %s680 = scalar_lea.hbm %s9, %s679
          %s681 = sshll.u32 %s674, 4
          %s682 = int_to_ptr.vmem [resolvable:$true] %s681
          %687 = dma.hbm_to_vmem [thread:$0]  %s680, 256, %s682, %s671, 64, 64, 4
        $region64: #{tpu_custom_call.1} parent=23 // pred_fallthru
          _
        // Predicated region
        $region65: #{tpu_custom_call.1} parent=23 // pred_check
          %p688 = pneg %p338
        $region66: #{tpu_custom_call.1} parent=23 // pred_check_branch
          %690 = sbr.rel (%p688) target = $region68
        $region67: #{tpu_custom_call.1} parent=23 // pred_region
          %s691 = sand.u32 %s46, 1
          %s692 = scalar_lea.sflag [#allocation19], %s691
          %s693 = sand.u32 %s328, 1
          %s694 = scalar_lea.vmem [#allocation20], %s693
          %s696 = ssub.s32 16, 16
          %697 = vsyncadd %s692, %s696
          %s698 = smul.addr %s54, 16
          %s699 = scalar_lea.hbm %s10, %s698
          %s701 = sshll.u32 %s694, 4
          %s702 = int_to_ptr.vmem [resolvable:$true] %s701
          %704 = dma.hbm_to_vmem [thread:$0]  %s699, 16, %s702, %s692
        $region68: #{tpu_custom_call.1} parent=23 // pred_fallthru
          _
        // Predicated region
        $region69: #{tpu_custom_call.1} parent=23 // pred_check
          %p705 = pneg %p364
        $region70: #{tpu_custom_call.1} parent=23 // pred_check_branch
          %707 = sbr.rel (%p705) target = $region72
        $region71: #{tpu_custom_call.1} parent=23 // pred_region
          %s708 = sand.u32 %s46, 1
          %s709 = scalar_lea.sflag [#allocation22], %s708
          %s710 = sand.u32 %s354, 1
          %s711 = smul.addr %s710, 64
          %s712 = scalar_lea.vmem [#allocation21], %s711
          %s714 = ssub.s32 1024, 1024
          %715 = vsyncadd %s709, %s714
          %s716 = smul.addr %s54, 16
          %s717 = smul.addr %s716, 64
          %s718 = scalar_lea.hbm %s11, %s717
          %s719 = sshll.u32 %s712, 4
          %s720 = int_to_ptr.vmem [resolvable:$true] %s719
          %725 = dma.hbm_to_vmem [thread:$0]  %s718, 1024, %s720, %s709, 64, 64, 4
        $region72: #{tpu_custom_call.1} parent=23 // pred_fallthru
          _
        // Predicated region
        $region73: #{tpu_custom_call.1} parent=23 // pred_check
          %p726 = pneg %p390
        $region74: #{tpu_custom_call.1} parent=23 // pred_check_branch
          %728 = sbr.rel (%p726) target = $region76
        $region75: #{tpu_custom_call.1} parent=23 // pred_region
          %s729 = sand.u32 %s46, 1
          %s730 = scalar_lea.sflag [#allocation22], %s729
          %s731 = sand.u32 %s380, 1
          %s732 = scalar_lea.vmem [#allocation23], %s731
          %s734 = ssub.s32 16, 16
          %735 = vsyncadd %s730, %s734
          %s736 = smul.addr %s54, 16
          %s737 = scalar_lea.hbm %s12, %s736
          %s739 = sshll.u32 %s732, 4
          %s740 = int_to_ptr.vmem [resolvable:$true] %s739
          %742 = dma.hbm_to_vmem [thread:$0]  %s737, 16, %s740, %s730
        $region76: #{tpu_custom_call.1} parent=23 // pred_fallthru
          _
      $region24: #{tpu_custom_call.1} parent=5 // pred_fallthru
        _
      %p743 = scmp.le.s32.totalorder 1, %s46
      %p744 = scmp.lt.s32.totalorder %s46, 5
      %p745 = pnand %p743, %p744
      %p746 = pneg %p745
      // Predicated region
      $region77: #{tpu_custom_call.1} parent=5 // pred_check
        _
      $region78: #{tpu_custom_call.1} parent=5 // pred_check_branch
        %748 = sbr.rel (%p745) target = $region80
      $region79: #{tpu_custom_call.1} parent=5 // pred_region
        %s749 = ssub.s32 %s46, 1
        %s750 = sand.u32 %s71, 1
        %s751 = scalar_lea.sflag [#allocation4], %s750
        %s752 = sand.u32 %s71, 1
        %s753 = smul.addr %s752, 8
        %s754 = scalar_lea.vmem [#allocation3], %s753
        // Predicated region
        $region81: #{tpu_custom_call.1} parent=79 // pred_check
          %p755 = pneg %p84
        $region82: #{tpu_custom_call.1} parent=79 // pred_check_branch
          %757 = sbr.rel (%p755) target = $region84
        $region83: #{tpu_custom_call.1} parent=79 // pred_region
          %758 = dma.done %s751, 128
        $region84: #{tpu_custom_call.1} parent=79 // pred_fallthru
          _
        %s759 = sand.u32 %s51, 1
        %s760 = scalar_lea.sflag [#allocation7], %s759
        %s761 = sand.u32 %s97, 1
        %s762 = scalar_lea.vmem [#allocation6], %s761
        // Predicated region
        $region85: #{tpu_custom_call.1} parent=79 // pred_check
          %p763 = pneg %p110
        $region86: #{tpu_custom_call.1} parent=79 // pred_check_branch
          %765 = sbr.rel (%p763) target = $region88
        $region87: #{tpu_custom_call.1} parent=79 // pred_region
          %766 = dma.done %s760, 16
        $region88: #{tpu_custom_call.1} parent=79 // pred_fallthru
          _
        %s767 = sand.u32 %s51, 1
        %s768 = scalar_lea.sflag [#allocation7], %s767
        %s769 = sand.u32 %s123, 1
        %s770 = scalar_lea.vmem [#allocation8], %s769
        // Predicated region
        $region89: #{tpu_custom_call.1} parent=79 // pred_check
          %p771 = pneg %p136
        $region90: #{tpu_custom_call.1} parent=79 // pred_check_branch
          %773 = sbr.rel (%p771) target = $region92
        $region91: #{tpu_custom_call.1} parent=79 // pred_region
          %774 = dma.done %s768, 16
        $region92: #{tpu_custom_call.1} parent=79 // pred_fallthru
          _
        %s775 = sand.u32 %s51, 1
        %s776 = scalar_lea.sflag [#allocation10], %s775
        %s777 = sand.u32 %s149, 1
        %s778 = smul.addr %s777, 16
        %s779 = scalar_lea.vmem [#allocation9], %s778
        // Predicated region
        $region93: #{tpu_custom_call.1} parent=79 // pred_check
          %p780 = pneg %p162
        $region94: #{tpu_custom_call.1} parent=79 // pred_check_branch
          %782 = sbr.rel (%p780) target = $region96
        $region95: #{tpu_custom_call.1} parent=79 // pred_region
          %783 = dma.done %s776, 256
        $region96: #{tpu_custom_call.1} parent=79 // pred_fallthru
          _
        %s784 = sand.u32 %s51, 1
        %s785 = scalar_lea.sflag [#allocation10], %s784
        %s786 = sand.u32 %s175, 1
        %s787 = scalar_lea.vmem [#allocation11], %s786
        // Predicated region
        $region97: #{tpu_custom_call.1} parent=79 // pred_check
          %p788 = pneg %p188
        $region98: #{tpu_custom_call.1} parent=79 // pred_check_branch
          %790 = sbr.rel (%p788) target = $region100
        $region99: #{tpu_custom_call.1} parent=79 // pred_region
          %791 = dma.done %s785, 16
        $region100: #{tpu_custom_call.1} parent=79 // pred_fallthru
          _
        %s792 = sand.u32 %s51, 1
        %s793 = scalar_lea.sflag [#allocation13], %s792
        %s794 = sand.u32 %s201, 1
        %s795 = smul.addr %s794, 16
        %s796 = scalar_lea.vmem [#allocation12], %s795
        // Predicated region
        $region101: #{tpu_custom_call.1} parent=79 // pred_check
          %p797 = pneg %p214
        $region102: #{tpu_custom_call.1} parent=79 // pred_check_branch
          %799 = sbr.rel (%p797) target = $region104
        $region103: #{tpu_custom_call.1} parent=79 // pred_region
          %800 = dma.done %s793, 256
        $region104: #{tpu_custom_call.1} parent=79 // pred_fallthru
          _
        %s801 = sand.u32 %s51, 1
        %s802 = scalar_lea.sflag [#allocation13], %s801
        %s803 = sand.u32 %s227, 1
        %s804 = scalar_lea.vmem [#allocation14], %s803
        // Predicated region
        $region105: #{tpu_custom_call.1} parent=79 // pred_check
          %p805 = pneg %p240
        $region106: #{tpu_custom_call.1} parent=79 // pred_check_branch
          %807 = sbr.rel (%p805) target = $region108
        $region107: #{tpu_custom_call.1} parent=79 // pred_region
          %808 = dma.done %s802, 16
        $region108: #{tpu_custom_call.1} parent=79 // pred_fallthru
          _
        %s809 = sand.u32 %s51, 1
        %s810 = scalar_lea.sflag [#allocation16], %s809
        %s811 = sand.u32 %s253, 1
        %s812 = scalar_lea.vmem [#allocation15], %s811
        // Predicated region
        $region109: #{tpu_custom_call.1} parent=79 // pred_check
          %p813 = pneg %p266
        $region110: #{tpu_custom_call.1} parent=79 // pred_check_branch
          %815 = sbr.rel (%p813) target = $region112
        $region111: #{tpu_custom_call.1} parent=79 // pred_region
          %816 = dma.done %s810, 16
        $region112: #{tpu_custom_call.1} parent=79 // pred_fallthru
          _
        %s817 = sand.u32 %s51, 1
        %s818 = scalar_lea.sflag [#allocation16], %s817
        %s819 = sand.u32 %s279, 1
        %s820 = scalar_lea.vmem [#allocation17], %s819
        // Predicated region
        $region113: #{tpu_custom_call.1} parent=79 // pred_check
          %p821 = pneg %p292
        $region114: #{tpu_custom_call.1} parent=79 // pred_check_branch
          %823 = sbr.rel (%p821) target = $region116
        $region115: #{tpu_custom_call.1} parent=79 // pred_region
          %824 = dma.done %s818, 16
        $region116: #{tpu_custom_call.1} parent=79 // pred_fallthru
          _
        %s825 = sand.u32 %s51, 1
        %s826 = scalar_lea.sflag [#allocation19], %s825
        %s827 = sand.u32 %s305, 1
        %s828 = smul.addr %s827, 16
        %s829 = scalar_lea.vmem [#allocation18], %s828
        // Predicated region
        $region117: #{tpu_custom_call.1} parent=79 // pred_check
          %p830 = pneg %p318
        $region118: #{tpu_custom_call.1} parent=79 // pred_check_branch
          %832 = sbr.rel (%p830) target = $region120
        $region119: #{tpu_custom_call.1} parent=79 // pred_region
          %833 = dma.done %s826, 256
        $region120: #{tpu_custom_call.1} parent=79 // pred_fallthru
          _
        %s834 = sand.u32 %s51, 1
        %s835 = scalar_lea.sflag [#allocation19], %s834
        %s836 = sand.u32 %s331, 1
        %s837 = scalar_lea.vmem [#allocation20], %s836
        // Predicated region
        $region121: #{tpu_custom_call.1} parent=79 // pred_check
          %p838 = pneg %p344
        $region122: #{tpu_custom_call.1} parent=79 // pred_check_branch
          %840 = sbr.rel (%p838) target = $region124
        $region123: #{tpu_custom_call.1} parent=79 // pred_region
          %841 = dma.done %s835, 16
        $region124: #{tpu_custom_call.1} parent=79 // pred_fallthru
          _
        %s842 = sand.u32 %s51, 1
        %s843 = scalar_lea.sflag [#allocation22], %s842
        %s844 = sand.u32 %s357, 1
        %s845 = smul.addr %s844, 64
        %s846 = scalar_lea.vmem [#allocation21], %s845
        // Predicated region
        $region125: #{tpu_custom_call.1} parent=79 // pred_check
          %p847 = pneg %p370
        $region126: #{tpu_custom_call.1} parent=79 // pred_check_branch
          %849 = sbr.rel (%p847) target = $region128
        $region127: #{tpu_custom_call.1} parent=79 // pred_region
          %850 = dma.done %s843, 1024
        $region128: #{tpu_custom_call.1} parent=79 // pred_fallthru
          _
        %s851 = sand.u32 %s51, 1
        %s852 = scalar_lea.sflag [#allocation22], %s851
        %s853 = sand.u32 %s383, 1
        %s854 = scalar_lea.vmem [#allocation23], %s853
        // Predicated region
        $region129: #{tpu_custom_call.1} parent=79 // pred_check
          %p855 = pneg %p396
        $region130: #{tpu_custom_call.1} parent=79 // pred_check_branch
          %857 = sbr.rel (%p855) target = $region132
        $region131: #{tpu_custom_call.1} parent=79 // pred_region
          %858 = dma.done %s852, 16
        $region132: #{tpu_custom_call.1} parent=79 // pred_fallthru
          _
        // Predicated region
        $region133: #{tpu_custom_call.1} parent=79 // pred_check
          %p859 = pneg %p417
        $region134: #{tpu_custom_call.1} parent=79 // pred_check_branch
          %861 = sbr.rel (%p859) target = $region136
        $region135: #{tpu_custom_call.1} parent=79 // pred_region
          %862 = dma.done [#allocation25], 16
        $region136: #{tpu_custom_call.1} parent=79 // pred_fallthru
          _
        // Predicated region
        $region137: #{tpu_custom_call.1} parent=79 // pred_check
          %p863 = pneg %p438
        $region138: #{tpu_custom_call.1} parent=79 // pred_check_branch
          %865 = sbr.rel (%p863) target = $region140
        $region139: #{tpu_custom_call.1} parent=79 // pred_region
          %866 = dma.done [#allocation25], 16
        $region140: #{tpu_custom_call.1} parent=79 // pred_fallthru
          _
        %s867 = sand.u32 %s71, 1
        %s868 = scalar_lea.sflag [#allocation4], %s867
        %s869 = sand.u32 %s71, 1
        %s870 = smul.addr %s869, 8
        %s871 = scalar_lea.vmem [#allocation3], %s870
        %p872 = pneg %p84
        %p873 = pneg %p81
        %s874 = sand.u32 %s51, 1
        %s875 = scalar_lea.sflag [#allocation7], %s874
        %s876 = sand.u32 %s97, 1
        %s877 = scalar_lea.vmem [#allocation6], %s876
        %p878 = pneg %p110
        %p879 = pneg %p107
        %s880 = sand.u32 %s51, 1
        %s881 = scalar_lea.sflag [#allocation7], %s880
        %s882 = sand.u32 %s123, 1
        %s883 = scalar_lea.vmem [#allocation8], %s882
        %p884 = pneg %p136
        %p885 = pneg %p133
        %s886 = sand.u32 %s51, 1
        %s887 = scalar_lea.sflag [#allocation10], %s886
        %s888 = sand.u32 %s149, 1
        %s889 = smul.addr %s888, 16
        %s890 = scalar_lea.vmem [#allocation9], %s889
        %p891 = pneg %p162
        %p892 = pneg %p159
        %s893 = sand.u32 %s51, 1
        %s894 = scalar_lea.sflag [#allocation10], %s893
        %s895 = sand.u32 %s175, 1
        %s896 = scalar_lea.vmem [#allocation11], %s895
        %p897 = pneg %p188
        %p898 = pneg %p185
        %s899 = sand.u32 %s51, 1
        %s900 = scalar_lea.sflag [#allocation13], %s899
        %s901 = sand.u32 %s201, 1
        %s902 = smul.addr %s901, 16
        %s903 = scalar_lea.vmem [#allocation12], %s902
        %p904 = pneg %p214
        %p905 = pneg %p211
        %s906 = sand.u32 %s51, 1
        %s907 = scalar_lea.sflag [#allocation13], %s906
        %s908 = sand.u32 %s227, 1
        %s909 = scalar_lea.vmem [#allocation14], %s908
        %p910 = pneg %p240
        %p911 = pneg %p237
        %s912 = sand.u32 %s51, 1
        %s913 = scalar_lea.sflag [#allocation16], %s912
        %s914 = sand.u32 %s253, 1
        %s915 = scalar_lea.vmem [#allocation15], %s914
        %p916 = pneg %p266
        %p917 = pneg %p263
        %s918 = sand.u32 %s51, 1
        %s919 = scalar_lea.sflag [#allocation16], %s918
        %s920 = sand.u32 %s279, 1
        %s921 = scalar_lea.vmem [#allocation17], %s920
        %p922 = pneg %p292
        %p923 = pneg %p289
        %s924 = sand.u32 %s51, 1
        %s925 = scalar_lea.sflag [#allocation19], %s924
        %s926 = sand.u32 %s305, 1
        %s927 = smul.addr %s926, 16
        %s928 = scalar_lea.vmem [#allocation18], %s927
        %p929 = pneg %p318
        %p930 = pneg %p315
        %s931 = sand.u32 %s51, 1
        %s932 = scalar_lea.sflag [#allocation19], %s931
        %s933 = sand.u32 %s331, 1
        %s934 = scalar_lea.vmem [#allocation20], %s933
        %p935 = pneg %p344
        %p936 = pneg %p341
        %s937 = sand.u32 %s51, 1
        %s938 = scalar_lea.sflag [#allocation22], %s937
        %s939 = sand.u32 %s357, 1
        %s940 = smul.addr %s939, 64
        %s941 = scalar_lea.vmem [#allocation21], %s940
        %p942 = pneg %p370
        %p943 = pneg %p367
        %s944 = sand.u32 %s51, 1
        %s945 = scalar_lea.sflag [#allocation22], %s944
        %s946 = sand.u32 %s383, 1
        %s947 = scalar_lea.vmem [#allocation23], %s946
        %p948 = pneg %p396
        %p949 = pneg %p393
        %p950 = pneg %p417
        %p951 = pneg %p414
        %p952 = pneg %p438
        %p953 = pneg %p435
        %p954 = pneg %p464
        %p955 = pneg %p461
        %s956 = sand.u32 %s451, 1
        %s957 = scalar_lea.sflag [#allocation5], %s956
        %s958 = sand.u32 %s451, 1
        %s959 = smul.addr %s958, 8
        %s960 = scalar_lea.vmem [#allocation27], %s959
        %p962 = scmp.eq.s32.totalorder %s56, 0
        // Predicated region
        $region141: #{tpu_custom_call.1} parent=79 // pred_check
          %p963 = pneg %p962
        $region142: #{tpu_custom_call.1} parent=79 // pred_check_branch
          %965 = sbr.rel (%p963) target = $region144
        $region143: #{tpu_custom_call.1} parent=79 // pred_region
          %v966 = vld [vmem:[%s754] sm:$0xff]
          %vm967 = vcmask 261120
          %968 = vst.msk [vmem:[#allocation2] sm:$0xff] %vm967, %v966
        $region144: #{tpu_custom_call.1} parent=79 // pred_fallthru
          _
        %v969 = vld [vmem:[#allocation2] sm:$0xff]
        %v970 = vld [vmem:[%s762] sm:$0x1]
        %v971 = vld [vmem:[%s770] sm:$0x1]
        %vm972 = vcmask 261120
        %v973 = vsel %vm972, %v969, 0.0
        %974 = vadd.xlane.f32.xlu0 %v973
        %v975 = vpop.xlane.xlu0 %974
        %v976 = vrcp.pop 32.0
        %v977 = vmul.f32 %v975, %v976
        %v978 = vsub.f32 %v969, %v977
        %v979 = vmul.f32 %v978, %v978
        %v980 = vsel %vm972, %v979, 0.0
        %981 = vadd.xlane.f32.xlu0 %v980
        %v982 = vpop.xlane.xlu0 %981
        %v983 = vmul.f32 %v982, %v976
        %v984 = vadd.f32 %v983, 1e-05
        %v985 = vrsqrt.pop %v984
        %v986 = vmul.f32 %v978, %v985
        %v988 = vlaneseq
        %v989 = vshrl.u32 %v988, 7
        %v990 = vsub.s32 0, %v989
        %v991 = vrot.slane %v970, %v990
        %v993 = vmul.f32 %v986, %v991
        %v995 = vlaneseq
        %v996 = vshrl.u32 %v995, 7
        %v997 = vsub.s32 0, %v996
        %v998 = vrot.slane %v971, %v997
        %v1000 = vadd.f32 %v993, %v998
        %v1001 = vpack.c.bf16 %v1000, %v1000
        %v1002 = vld [vmem:[%s779] sm:$0xf]
        %v1003 = vld [vmem:[%s779 + $0x4] sm:$0xf]
        %v1004 = vld [vmem:[%s779 + $0x8] sm:$0xf]
        %v1005 = vld [vmem:[%s779 + $0xc] sm:$0xf]
        %v1006 = vld [vmem:[%s787] sm:$0x1]
        %v1008 = vlaneseq
        %v1009 = vshrl.u32 %v1008, 7
        %v1010 = vsub.s32 0, %v1009
        %v1011 = vrot.slane %v1006, %v1010
        %v1017 = vunpack.c.l.b16 %v1002
        %v1018 = vunpack.c.l.b16 %v1003
        %v1019 = vunpack.c.l.b16 %v1004
        %v1020 = vunpack.c.l.b16 %v1005
        %v1021 = vpack.c.b16 %v1018, %v1017
        %v1022 = vpack.c.b16 %v1020, %v1019
        %v1026 = vsel %vm972, %v1001, 0
        %1028 = vmatprep.subr.bf16.mxu0 0
        %1029 = vmatpush1.bf16.msra.mxu0 %v1021
        %1030 = vmatprep.subr.bf16.mxu0 0
        %1031 = vmatpush1.bf16.msra.mxu0 %v1022
        %1032 = vmatprep.subr.bf16.mxu0 0
        %1033 = vmatpush1.bf16.msra.mxu0 0
        %1034 = vmatprep.subr.bf16.mxu0 0
        %1035 = vmatpush1.bf16.msra.mxu0 0
        %1036 = vmatprep.subr.bf16.mxu0 0
        %1037 = vmatpush1.bf16.msra.mxu0 0
        %1038 = vmatprep.subr.bf16.mxu0 0
        %1039 = vmatpush1.bf16.msra.mxu0 0
        %1040 = vmatprep.subr.bf16.mxu0 0
        %1041 = vmatpush1.bf16.msra.mxu0 0
        %1042 = vmatprep.subr.bf16.mxu0 0
        %1043 = vmatpush1.bf16.msra.mxu0 0
        %1044 = vmatprep.subr.bf16.mxu0 0
        %1045 = vmatpush1.bf16.msra.mxu0 0
        %1046 = vmatprep.subr.bf16.mxu0 0
        %1047 = vmatpush1.bf16.msra.mxu0 0
        %1048 = vmatprep.subr.bf16.mxu0 0
        %1049 = vmatpush1.bf16.msra.mxu0 0
        %1050 = vmatprep.subr.bf16.mxu0 0
        %1051 = vmatpush1.bf16.msra.mxu0 0
        %1052 = vmatprep.subr.bf16.mxu0 0
        %1053 = vmatpush1.bf16.msra.mxu0 0
        %1054 = vmatprep.subr.bf16.mxu0 0
        %1055 = vmatpush1.bf16.msra.mxu0 0
        %1056 = vmatprep.subr.bf16.mxu0 0
        %1057 = vmatpush1.bf16.msra.mxu0 0
        %1058 = vmatprep.subr.bf16.mxu0 0
        %1059 = vmatpush1.bf16.msra.mxu0 0
        %1060 = vmatprep.mubr.bf16.mxu0 0
        %1061 = vmatmul.mubr.bf16.gmra.mrb[0].mxu0 %v1026
        %v1062 = vpop.f32.mrb[0].mxu0
        %v1063 = vadd.f32 %v1011, %v1062
        %v1064 = vpop.f32.mrb[0].mxu0
        %v1065 = vpop.f32.mrb[0].mxu0
        %v1066 = vpop.f32.mrb[0].mxu0
        %1067 = vdwg.mxu0
        %v1068 = vpack.c.bf16 %v1063, %v1063
        %1070 = vrot.lane.b32.xlu0 %v1068, 120
        %v1071 = vpop.permute.xlu0 %1070
        %1072 = vrot.lane.b32.xlu0 %v1068, 112
        %v1073 = vpop.permute.xlu0 %1072
        %1074 = vrot.lane.b32.xlu0 %v1068, 104
        %v1075 = vpop.permute.xlu0 %1074
        %1076 = vrot.lane.b32.xlu0 %v1068, 96
        %v1077 = vpop.permute.xlu0 %1076
        %vm1078 = vcmask 64512
        %v1080 = vsel %vm1078, %v1068, 0
        %v1083 = vsel %vm1078, %v1077, 0
        %1085 = vmatprep.subr.bf16.mxu0 0
        %1086 = vmatpush1.bf16.xpose.msra.mxu0 %v1083
        %1087 = vmatprep.subr.bf16.mxu0 0
        %1088 = vmatpush1.bf16.xpose.msra.mxu0 0
        %1089 = vmatprep.subr.bf16.mxu0 0
        %1090 = vmatpush1.bf16.xpose.msra.mxu0 0
        %1091 = vmatprep.subr.bf16.mxu0 0
        %1092 = vmatpush1.bf16.xpose.msra.mxu0 0
        %1093 = vmatprep.subr.bf16.mxu0 0
        %1094 = vmatpush1.bf16.xpose.msra.mxu0 0
        %1095 = vmatprep.subr.bf16.mxu0 0
        %1096 = vmatpush1.bf16.xpose.msra.mxu0 0
        %1097 = vmatprep.subr.bf16.mxu0 0
        %1098 = vmatpush1.bf16.xpose.msra.mxu0 0
        %1099 = vmatprep.subr.bf16.mxu0 0
        %1100 = vmatpush1.bf16.xpose.msra.mxu0 0
        %1101 = vmatprep.subr.bf16.mxu0 0
        %1102 = vmatpush1.bf16.xpose.msra.mxu0 0
        %1103 = vmatprep.subr.bf16.mxu0 0
        %1104 = vmatpush1.bf16.xpose.msra.mxu0 0
        %1105 = vmatprep.subr.bf16.mxu0 0
        %1106 = vmatpush1.bf16.xpose.msra.mxu0 0
        %1107 = vmatprep.subr.bf16.mxu0 0
        %1108 = vmatpush1.bf16.xpose.msra.mxu0 0
        %1109 = vmatprep.subr.bf16.mxu0 0
        %1110 = vmatpush1.bf16.xpose.msra.mxu0 0
        %1111 = vmatprep.subr.bf16.mxu0 0
        %1112 = vmatpush1.bf16.xpose.msra.mxu0 0
        %1113 = vmatprep.subr.bf16.mxu0 0
        %1114 = vmatpush1.bf16.xpose.msra.mxu0 0
        %1115 = vmatprep.subr.bf16.mxu0 0
        %1116 = vmatpush1.bf16.xpose.msra.mxu0 0
        %1117 = vmatprep.mubr.bf16.mxu0 0
        %1118 = vmatmul.mubr.bf16.gmra.mrb[0].mxu0 %v1080
        %v1119 = vpop.f32.mrb[0].mxu0
        %v1120 = vadd.f32 0.0, %v1119
        %v1121 = vpop.f32.mrb[0].mxu0
        %v1122 = vpop.f32.mrb[0].mxu0
        %v1123 = vpop.f32.mrb[0].mxu0
        %1124 = vdwg.mxu0
        %1125 = vrot.lane.b32.xlu0 %v1071, 96
        %v1126 = vpop.permute.xlu0 %1125
        %v1128 = vsel %vm1078, %v1071, 0
        %v1131 = vsel %vm1078, %v1126, 0
        %1133 = vmatprep.subr.bf16.mxu0 0
        %1134 = vmatpush1.bf16.xpose.msra.mxu0 %v1131
        %1135 = vmatprep.subr.bf16.mxu0 0
        %1136 = vmatpush1.bf16.xpose.msra.mxu0 0
        %1137 = vmatprep.subr.bf16.mxu0 0
        %1138 = vmatpush1.bf16.xpose.msra.mxu0 0
        %1139 = vmatprep.subr.bf16.mxu0 0
        %1140 = vmatpush1.bf16.xpose.msra.mxu0 0
        %1141 = vmatprep.subr.bf16.mxu0 0
        %1142 = vmatpush1.bf16.xpose.msra.mxu0 0
        %1143 = vmatprep.subr.bf16.mxu0 0
        %1144 = vmatpush1.bf16.xpose.msra.mxu0 0
        %1145 = vmatprep.subr.bf16.mxu0 0
        %1146 = vmatpush1.bf16.xpose.msra.mxu0 0
        %1147 = vmatprep.subr.bf16.mxu0 0
        %1148 = vmatpush1.bf16.xpose.msra.mxu0 0
        %1149 = vmatprep.subr.bf16.mxu0 0
        %1150 = vmatpush1.bf16.xpose.msra.mxu0 0
        %1151 = vmatprep.subr.bf16.mxu0 0
        %1152 = vmatpush1.bf16.xpose.msra.mxu0 0
        %1153 = vmatprep.subr.bf16.mxu0 0
        %1154 = vmatpush1.bf16.xpose.msra.mxu0 0
        %1155 = vmatprep.subr.bf16.mxu0 0
        %1156 = vmatpush1.bf16.xpose.msra.mxu0 0
        %1157 = vmatprep.subr.bf16.mxu0 0
        %1158 = vmatpush1.bf16.xpose.msra.mxu0 0
        %1159 = vmatprep.subr.bf16.mxu0 0
        %1160 = vmatpush1.bf16.xpose.msra.mxu0 0
        %1161 = vmatprep.subr.bf16.mxu0 0
        %1162 = vmatpush1.bf16.xpose.msra.mxu0 0
        %1163 = vmatprep.subr.bf16.mxu0 0
        %1164 = vmatpush1.bf16.xpose.msra.mxu0 0
        %1165 = vmatprep.mubr.bf16.mxu0 0
        %1166 = vmatmul.mubr.bf16.gmra.mrb[0].mxu0 %v1128
        %v1167 = vpop.f32.mrb[0].mxu0
        %v1168 = vadd.f32 0.0, %v1167
        %v1169 = vpop.f32.mrb[0].mxu0
        %v1170 = vpop.f32.mrb[0].mxu0
        %v1171 = vpop.f32.mrb[0].mxu0
        %1172 = vdwg.mxu0
        %1173 = vrot.lane.b32.xlu0 %v1073, 96
        %v1174 = vpop.permute.xlu0 %1173
        %v1176 = vsel %vm1078, %v1073, 0
        %v1179 = vsel %vm1078, %v1174, 0
        %1181 = vmatprep.subr.bf16.mxu0 0
        %1182 = vmatpush1.bf16.xpose.msra.mxu0 %v1179
        %1183 = vmatprep.subr.bf16.mxu0 0
        %1184 = vmatpush1.bf16.xpose.msra.mxu0 0
        %1185 = vmatprep.subr.bf16.mxu0 0
        %1186 = vmatpush1.bf16.xpose.msra.mxu0 0
        %1187 = vmatprep.subr.bf16.mxu0 0
        %1188 = vmatpush1.bf16.xpose.msra.mxu0 0
        %1189 = vmatprep.subr.bf16.mxu0 0
        %1190 = vmatpush1.bf16.xpose.msra.mxu0 0
        %1191 = vmatprep.subr.bf16.mxu0 0
        %1192 = vmatpush1.bf16.xpose.msra.mxu0 0
        %1193 = vmatprep.subr.bf16.mxu0 0
        %1194 = vmatpush1.bf16.xpose.msra.mxu0 0
        %1195 = vmatprep.subr.bf16.mxu0 0
        %1196 = vmatpush1.bf16.xpose.msra.mxu0 0
        %1197 = vmatprep.subr.bf16.mxu0 0
        %1198 = vmatpush1.bf16.xpose.msra.mxu0 0
        %1199 = vmatprep.subr.bf16.mxu0 0
        %1200 = vmatpush1.bf16.xpose.msra.mxu0 0
        %1201 = vmatprep.subr.bf16.mxu0 0
        %1202 = vmatpush1.bf16.xpose.msra.mxu0 0
        %1203 = vmatprep.subr.bf16.mxu0 0
        %1204 = vmatpush1.bf16.xpose.msra.mxu0 0
        %1205 = vmatprep.subr.bf16.mxu0 0
        %1206 = vmatpush1.bf16.xpose.msra.mxu0 0
        %1207 = vmatprep.subr.bf16.mxu0 0
        %1208 = vmatpush1.bf16.xpose.msra.mxu0 0
        %1209 = vmatprep.subr.bf16.mxu0 0
        %1210 = vmatpush1.bf16.xpose.msra.mxu0 0
        %1211 = vmatprep.subr.bf16.mxu0 0
        %1212 = vmatpush1.bf16.xpose.msra.mxu0 0
        %1213 = vmatprep.mubr.bf16.mxu0 0
        %1214 = vmatmul.mubr.bf16.gmra.mrb[0].mxu0 %v1176
        %v1215 = vpop.f32.mrb[0].mxu0
        %v1216 = vadd.f32 0.0, %v1215
        %v1217 = vpop.f32.mrb[0].mxu0
        %v1218 = vpop.f32.mrb[0].mxu0
        %v1219 = vpop.f32.mrb[0].mxu0
        %1220 = vdwg.mxu0
        %1221 = vrot.lane.b32.xlu0 %v1075, 96
        %v1222 = vpop.permute.xlu0 %1221
        %v1224 = vsel %vm1078, %v1075, 0
        %v1227 = vsel %vm1078, %v1222, 0
        %1229 = vmatprep.subr.bf16.mxu0 0
        %1230 = vmatpush1.bf16.xpose.msra.mxu0 %v1227
        %1231 = vmatprep.subr.bf16.mxu0 0
        %1232 = vmatpush1.bf16.xpose.msra.mxu0 0
        %1233 = vmatprep.subr.bf16.mxu0 0
        %1234 = vmatpush1.bf16.xpose.msra.mxu0 0
        %1235 = vmatprep.subr.bf16.mxu0 0
        %1236 = vmatpush1.bf16.xpose.msra.mxu0 0
        %1237 = vmatprep.subr.bf16.mxu0 0
        %1238 = vmatpush1.bf16.xpose.msra.mxu0 0
        %1239 = vmatprep.subr.bf16.mxu0 0
        %1240 = vmatpush1.bf16.xpose.msra.mxu0 0
        %1241 = vmatprep.subr.bf16.mxu0 0
        %1242 = vmatpush1.bf16.xpose.msra.mxu0 0
        %1243 = vmatprep.subr.bf16.mxu0 0
        %1244 = vmatpush1.bf16.xpose.msra.mxu0 0
        %1245 = vmatprep.subr.bf16.mxu0 0
        %1246 = vmatpush1.bf16.xpose.msra.mxu0 0
        %1247 = vmatprep.subr.bf16.mxu0 0
        %1248 = vmatpush1.bf16.xpose.msra.mxu0 0
        %1249 = vmatprep.subr.bf16.mxu0 0
        %1250 = vmatpush1.bf16.xpose.msra.mxu0 0
        %1251 = vmatprep.subr.bf16.mxu0 0
        %1252 = vmatpush1.bf16.xpose.msra.mxu0 0
        %1253 = vmatprep.subr.bf16.mxu0 0
        %1254 = vmatpush1.bf16.xpose.msra.mxu0 0
        %1255 = vmatprep.subr.bf16.mxu0 0
        %1256 = vmatpush1.bf16.xpose.msra.mxu0 0
        %1257 = vmatprep.subr.bf16.mxu0 0
        %1258 = vmatpush1.bf16.xpose.msra.mxu0 0
        %1259 = vmatprep.subr.bf16.mxu0 0
        %1260 = vmatpush1.bf16.xpose.msra.mxu0 0
        %1261 = vmatprep.mubr.bf16.mxu0 0
        %1262 = vmatmul.mubr.bf16.gmra.mrb[0].mxu0 %v1224
        %v1263 = vpop.f32.mrb[0].mxu0
        %v1264 = vadd.f32 0.0, %v1263
        %v1265 = vpop.f32.mrb[0].mxu0
        %v1266 = vpop.f32.mrb[0].mxu0
        %v1267 = vpop.f32.mrb[0].mxu0
        %1268 = vdwg.mxu0
        %v1269 = vmul.f32 %v1120, 0.35355338
        %v1270 = vmul.f32 %v1168, 0.35355338
        %v1271 = vmul.f32 %v1216, 0.35355338
        %v1272 = vmul.f32 %v1264, 0.35355338
        %v1273 = vsel %vm1078, %v1269, -inf
        %1274 = vmax.xlane.f32.xlu0 %v1273
        %v1275 = vpop.xlane.xlu0 %1274
        %v1276 = vsel %vm1078, %v1270, -inf
        %1277 = vmax.xlane.f32.xlu0 %v1276
        %v1278 = vpop.xlane.xlu0 %1277
        %v1279 = vsel %vm1078, %v1271, -inf
        %1280 = vmax.xlane.f32.xlu0 %v1279
        %v1281 = vpop.xlane.xlu0 %1280
        %v1282 = vsel %vm1078, %v1272, -inf
        %1283 = vmax.xlane.f32.xlu0 %v1282
        %v1284 = vpop.xlane.xlu0 %1283
        %v1285 = vsub.f32 %v1269, %v1275
        %v1286 = vsub.f32 %v1270, %v1278
        %v1287 = vsub.f32 %v1271, %v1281
        %v1288 = vsub.f32 %v1272, %v1284
        %v1289 = vmul.f32 %v1285, 1.442695
        %v1290 = vpow.pop %v1289
        %v1291 = vmul.f32 %v1286, 1.442695
        %v1292 = vpow.pop %v1291
        %v1293 = vmul.f32 %v1287, 1.442695
        %v1294 = vpow.pop %v1293
        %v1295 = vmul.f32 %v1288, 1.442695
        %v1296 = vpow.pop %v1295
        %v1297 = vsel %vm1078, %v1290, 0.0
        %1298 = vadd.xlane.f32.xlu0 %v1297
        %v1299 = vpop.xlane.xlu0 %1298
        %v1300 = vsel %vm1078, %v1292, 0.0
        %1301 = vadd.xlane.f32.xlu0 %v1300
        %v1302 = vpop.xlane.xlu0 %1301
        %v1303 = vsel %vm1078, %v1294, 0.0
        %1304 = vadd.xlane.f32.xlu0 %v1303
        %v1305 = vpop.xlane.xlu0 %1304
        %v1306 = vsel %vm1078, %v1296, 0.0
        %1307 = vadd.xlane.f32.xlu0 %v1306
        %v1308 = vpop.xlane.xlu0 %1307
        %v1309 = vrcp.pop %v1299
        %v1310 = vrcp.pop %v1302
        %v1311 = vrcp.pop %v1305
        %v1312 = vrcp.pop %v1308
        %v1313 = vmul.f32 %v1290, %v1309
        %v1314 = vmul.f32 %v1292, %v1310
        %v1315 = vmul.f32 %v1294, %v1311
        %v1316 = vmul.f32 %v1296, %v1312
        %v1317 = vpack.c.bf16 %v1313, %v1313
        %v1318 = vpack.c.bf16 %v1314, %v1314
        %v1319 = vpack.c.bf16 %v1315, %v1315
        %v1320 = vpack.c.bf16 %v1316, %v1316
        %1321 = vrot.lane.b32.xlu0 %v1068, 64
        %v1322 = vpop.permute.xlu0 %1321
        %v1324 = vsel %vm1078, %v1317, 0
        %vm1326 = vcmask 1043456
        %v1328 = vsel %vm1326, %v1322, 0
        %1330 = vmatprep.subr.bf16.mxu0 0
        %1331 = vmatpush1.bf16.msra.mxu0 %v1328
        %1332 = vmatprep.subr.bf16.mxu0 0
        %1333 = vmatpush1.bf16.msra.mxu0 0
        %1334 = vmatprep.subr.bf16.mxu0 0
        %1335 = vmatpush1.bf16.msra.mxu0 0
        %1336 = vmatprep.subr.bf16.mxu0 0
        %1337 = vmatpush1.bf16.msra.mxu0 0
        %1338 = vmatprep.subr.bf16.mxu0 0
        %1339 = vmatpush1.bf16.msra.mxu0 0
        %1340 = vmatprep.subr.bf16.mxu0 0
        %1341 = vmatpush1.bf16.msra.mxu0 0
        %1342 = vmatprep.subr.bf16.mxu0 0
        %1343 = vmatpush1.bf16.msra.mxu0 0
        %1344 = vmatprep.subr.bf16.mxu0 0
        %1345 = vmatpush1.bf16.msra.mxu0 0
        %1346 = vmatprep.subr.bf16.mxu0 0
        %1347 = vmatpush1.bf16.msra.mxu0 0
        %1348 = vmatprep.subr.bf16.mxu0 0
        %1349 = vmatpush1.bf16.msra.mxu0 0
        %1350 = vmatprep.subr.bf16.mxu0 0
        %1351 = vmatpush1.bf16.msra.mxu0 0
        %1352 = vmatprep.subr.bf16.mxu0 0
        %1353 = vmatpush1.bf16.msra.mxu0 0
        %1354 = vmatprep.subr.bf16.mxu0 0
        %1355 = vmatpush1.bf16.msra.mxu0 0
        %1356 = vmatprep.subr.bf16.mxu0 0
        %1357 = vmatpush1.bf16.msra.mxu0 0
        %1358 = vmatprep.subr.bf16.mxu0 0
        %1359 = vmatpush1.bf16.msra.mxu0 0
        %1360 = vmatprep.subr.bf16.mxu0 0
        %1361 = vmatpush1.bf16.msra.mxu0 0
        %1362 = vmatprep.mubr.bf16.mxu0 0
        %1363 = vmatmul.mubr.bf16.gmra.mrb[0].mxu0 %v1324
        %v1364 = vpop.f32.mrb[0].mxu0
        %v1365 = vadd.f32 0.0, %v1364
        %v1366 = vpop.f32.mrb[0].mxu0
        %v1367 = vpop.f32.mrb[0].mxu0
        %v1368 = vpop.f32.mrb[0].mxu0
        %1369 = vdwg.mxu0
        %1370 = vrot.lane.b32.xlu0 %v1071, 64
        %v1371 = vpop.permute.xlu0 %1370
        %v1373 = vsel %vm1078, %v1318, 0
        %v1376 = vsel %vm1326, %v1371, 0
        %1378 = vmatprep.subr.bf16.mxu0 0
        %1379 = vmatpush1.bf16.msra.mxu0 %v1376
        %1380 = vmatprep.subr.bf16.mxu0 0
        %1381 = vmatpush1.bf16.msra.mxu0 0
        %1382 = vmatprep.subr.bf16.mxu0 0
        %1383 = vmatpush1.bf16.msra.mxu0 0
        %1384 = vmatprep.subr.bf16.mxu0 0
        %1385 = vmatpush1.bf16.msra.mxu0 0
        %1386 = vmatprep.subr.bf16.mxu0 0
        %1387 = vmatpush1.bf16.msra.mxu0 0
        %1388 = vmatprep.subr.bf16.mxu0 0
        %1389 = vmatpush1.bf16.msra.mxu0 0
        %1390 = vmatprep.subr.bf16.mxu0 0
        %1391 = vmatpush1.bf16.msra.mxu0 0
        %1392 = vmatprep.subr.bf16.mxu0 0
        %1393 = vmatpush1.bf16.msra.mxu0 0
        %1394 = vmatprep.subr.bf16.mxu0 0
        %1395 = vmatpush1.bf16.msra.mxu0 0
        %1396 = vmatprep.subr.bf16.mxu0 0
        %1397 = vmatpush1.bf16.msra.mxu0 0
        %1398 = vmatprep.subr.bf16.mxu0 0
        %1399 = vmatpush1.bf16.msra.mxu0 0
        %1400 = vmatprep.subr.bf16.mxu0 0
        %1401 = vmatpush1.bf16.msra.mxu0 0
        %1402 = vmatprep.subr.bf16.mxu0 0
        %1403 = vmatpush1.bf16.msra.mxu0 0
        %1404 = vmatprep.subr.bf16.mxu0 0
        %1405 = vmatpush1.bf16.msra.mxu0 0
        %1406 = vmatprep.subr.bf16.mxu0 0
        %1407 = vmatpush1.bf16.msra.mxu0 0
        %1408 = vmatprep.subr.bf16.mxu0 0
        %1409 = vmatpush1.bf16.msra.mxu0 0
        %1410 = vmatprep.mubr.bf16.mxu0 0
        %1411 = vmatmul.mubr.bf16.gmra.mrb[0].mxu0 %v1373
        %v1412 = vpop.f32.mrb[0].mxu0
        %v1413 = vadd.f32 0.0, %v1412
        %v1414 = vpop.f32.mrb[0].mxu0
        %v1415 = vpop.f32.mrb[0].mxu0
        %v1416 = vpop.f32.mrb[0].mxu0
        %1417 = vdwg.mxu0
        %1418 = vrot.lane.b32.xlu0 %v1073, 64
        %v1419 = vpop.permute.xlu0 %1418
        %v1421 = vsel %vm1078, %v1319, 0
        %v1424 = vsel %vm1326, %v1419, 0
        %1426 = vmatprep.subr.bf16.mxu0 0
        %1427 = vmatpush1.bf16.msra.mxu0 %v1424
        %1428 = vmatprep.subr.bf16.mxu0 0
        %1429 = vmatpush1.bf16.msra.mxu0 0
        %1430 = vmatprep.subr.bf16.mxu0 0
        %1431 = vmatpush1.bf16.msra.mxu0 0
        %1432 = vmatprep.subr.bf16.mxu0 0
        %1433 = vmatpush1.bf16.msra.mxu0 0
        %1434 = vmatprep.subr.bf16.mxu0 0
        %1435 = vmatpush1.bf16.msra.mxu0 0
        %1436 = vmatprep.subr.bf16.mxu0 0
        %1437 = vmatpush1.bf16.msra.mxu0 0
        %1438 = vmatprep.subr.bf16.mxu0 0
        %1439 = vmatpush1.bf16.msra.mxu0 0
        %1440 = vmatprep.subr.bf16.mxu0 0
        %1441 = vmatpush1.bf16.msra.mxu0 0
        %1442 = vmatprep.subr.bf16.mxu0 0
        %1443 = vmatpush1.bf16.msra.mxu0 0
        %1444 = vmatprep.subr.bf16.mxu0 0
        %1445 = vmatpush1.bf16.msra.mxu0 0
        %1446 = vmatprep.subr.bf16.mxu0 0
        %1447 = vmatpush1.bf16.msra.mxu0 0
        %1448 = vmatprep.subr.bf16.mxu0 0
        %1449 = vmatpush1.bf16.msra.mxu0 0
        %1450 = vmatprep.subr.bf16.mxu0 0
        %1451 = vmatpush1.bf16.msra.mxu0 0
        %1452 = vmatprep.subr.bf16.mxu0 0
        %1453 = vmatpush1.bf16.msra.mxu0 0
        %1454 = vmatprep.subr.bf16.mxu0 0
        %1455 = vmatpush1.bf16.msra.mxu0 0
        %1456 = vmatprep.subr.bf16.mxu0 0
        %1457 = vmatpush1.bf16.msra.mxu0 0
        %1458 = vmatprep.mubr.bf16.mxu0 0
        %1459 = vmatmul.mubr.bf16.gmra.mrb[0].mxu0 %v1421
        %v1460 = vpop.f32.mrb[0].mxu0
        %v1461 = vadd.f32 0.0, %v1460
        %v1462 = vpop.f32.mrb[0].mxu0
        %v1463 = vpop.f32.mrb[0].mxu0
        %v1464 = vpop.f32.mrb[0].mxu0
        %1465 = vdwg.mxu0
        %1466 = vrot.lane.b32.xlu0 %v1075, 64
        %v1467 = vpop.permute.xlu0 %1466
        %v1469 = vsel %vm1078, %v1320, 0
        %v1472 = vsel %vm1326, %v1467, 0
        %1474 = vmatprep.subr.bf16.mxu0 0
        %1475 = vmatpush1.bf16.msra.mxu0 %v1472
        %1476 = vmatprep.subr.bf16.mxu0 0
        %1477 = vmatpush1.bf16.msra.mxu0 0
        %1478 = vmatprep.subr.bf16.mxu0 0
        %1479 = vmatpush1.bf16.msra.mxu0 0
        %1480 = vmatprep.subr.bf16.mxu0 0
        %1481 = vmatpush1.bf16.msra.mxu0 0
        %1482 = vmatprep.subr.bf16.mxu0 0
        %1483 = vmatpush1.bf16.msra.mxu0 0
        %1484 = vmatprep.subr.bf16.mxu0 0
        %1485 = vmatpush1.bf16.msra.mxu0 0
        %1486 = vmatprep.subr.bf16.mxu0 0
        %1487 = vmatpush1.bf16.msra.mxu0 0
        %1488 = vmatprep.subr.bf16.mxu0 0
        %1489 = vmatpush1.bf16.msra.mxu0 0
        %1490 = vmatprep.subr.bf16.mxu0 0
        %1491 = vmatpush1.bf16.msra.mxu0 0
        %1492 = vmatprep.subr.bf16.mxu0 0
        %1493 = vmatpush1.bf16.msra.mxu0 0
        %1494 = vmatprep.subr.bf16.mxu0 0
        %1495 = vmatpush1.bf16.msra.mxu0 0
        %1496 = vmatprep.subr.bf16.mxu0 0
        %1497 = vmatpush1.bf16.msra.mxu0 0
        %1498 = vmatprep.subr.bf16.mxu0 0
        %1499 = vmatpush1.bf16.msra.mxu0 0
        %1500 = vmatprep.subr.bf16.mxu0 0
        %1501 = vmatpush1.bf16.msra.mxu0 0
        %1502 = vmatprep.subr.bf16.mxu0 0
        %1503 = vmatpush1.bf16.msra.mxu0 0
        %1504 = vmatprep.subr.bf16.mxu0 0
        %1505 = vmatpush1.bf16.msra.mxu0 0
        %1506 = vmatprep.mubr.bf16.mxu0 0
        %1507 = vmatmul.mubr.bf16.gmra.mrb[0].mxu0 %v1469
        %v1508 = vpop.f32.mrb[0].mxu0
        %v1509 = vadd.f32 0.0, %v1508
        %v1510 = vpop.f32.mrb[0].mxu0
        %v1511 = vpop.f32.mrb[0].mxu0
        %v1512 = vpop.f32.mrb[0].mxu0
        %1513 = vdwg.mxu0
        %1515 = vrot.lane.b32.xlu0 %v1413, 8
        %v1516 = vpop.permute.xlu0 %1515
        %1519 = vrot.lane.b32.xlu0 %v1461, 16
        %v1520 = vpop.permute.xlu0 %1519
        %1523 = vrot.lane.b32.xlu0 %v1509, 24
        %v1524 = vpop.permute.xlu0 %1523
        %v1526 = vsel %vm1078, %v1365, %v1516
        %vm1527 = vcmask 130048
        %v1528 = vsel %vm1527, %v1526, %v1520
        %vm1529 = vcmask 195584
        %v1530 = vsel %vm1529, %v1528, %v1524
        %v1531 = vpack.c.bf16 %v1530, %v1530
        %v1532 = vld [vmem:[%s796] sm:$0xf]
        %v1533 = vld [vmem:[%s796 + $0x4] sm:$0xf]
        %v1534 = vld [vmem:[%s796 + $0x8] sm:$0xf]
        %v1535 = vld [vmem:[%s796 + $0xc] sm:$0xf]
        %v1536 = vld [vmem:[%s804] sm:$0x1]
        %v1538 = vlaneseq
        %v1539 = vshrl.u32 %v1538, 7
        %v1540 = vsub.s32 0, %v1539
        %v1541 = vrot.slane %v1536, %v1540
        %v1547 = vunpack.c.l.b16 %v1532
        %v1548 = vunpack.c.l.b16 %v1533
        %v1549 = vunpack.c.l.b16 %v1534
        %v1550 = vunpack.c.l.b16 %v1535
        %v1551 = vpack.c.b16 %v1548, %v1547
        %v1552 = vpack.c.b16 %v1550, %v1549
        %v1556 = vsel %vm972, %v1531, 0
        %1558 = vmatprep.subr.bf16.mxu0 0
        %1559 = vmatpush1.bf16.msra.mxu0 %v1551
        %1560 = vmatprep.subr.bf16.mxu0 0
        %1561 = vmatpush1.bf16.msra.mxu0 %v1552
        %1562 = vmatprep.subr.bf16.mxu0 0
        %1563 = vmatpush1.bf16.msra.mxu0 0
        %1564 = vmatprep.subr.bf16.mxu0 0
        %1565 = vmatpush1.bf16.msra.mxu0 0
        %1566 = vmatprep.subr.bf16.mxu0 0
        %1567 = vmatpush1.bf16.msra.mxu0 0
        %1568 = vmatprep.subr.bf16.mxu0 0
        %1569 = vmatpush1.bf16.msra.mxu0 0
        %1570 = vmatprep.subr.bf16.mxu0 0
        %1571 = vmatpush1.bf16.msra.mxu0 0
        %1572 = vmatprep.subr.bf16.mxu0 0
        %1573 = vmatpush1.bf16.msra.mxu0 0
        %1574 = vmatprep.subr.bf16.mxu0 0
        %1575 = vmatpush1.bf16.msra.mxu0 0
        %1576 = vmatprep.subr.bf16.mxu0 0
        %1577 = vmatpush1.bf16.msra.mxu0 0
        %1578 = vmatprep.subr.bf16.mxu0 0
        %1579 = vmatpush1.bf16.msra.mxu0 0
        %1580 = vmatprep.subr.bf16.mxu0 0
        %1581 = vmatpush1.bf16.msra.mxu0 0
        %1582 = vmatprep.subr.bf16.mxu0 0
        %1583 = vmatpush1.bf16.msra.mxu0 0
        %1584 = vmatprep.subr.bf16.mxu0 0
        %1585 = vmatpush1.bf16.msra.mxu0 0
        %1586 = vmatprep.subr.bf16.mxu0 0
        %1587 = vmatpush1.bf16.msra.mxu0 0
        %1588 = vmatprep.subr.bf16.mxu0 0
        %1589 = vmatpush1.bf16.msra.mxu0 0
        %1590 = vmatprep.mubr.bf16.mxu0 0
        %1591 = vmatmul.mubr.bf16.gmra.mrb[0].mxu0 %v1556
        %v1592 = vpop.f32.mrb[0].mxu0
        %v1593 = vadd.f32 %v1541, %v1592
        %v1594 = vpop.f32.mrb[0].mxu0
        %v1595 = vpop.f32.mrb[0].mxu0
        %v1596 = vpop.f32.mrb[0].mxu0
        %1597 = vdwg.mxu0
        %v1598 = vadd.f32 %v969, %v1593
        %v1599 = vld [vmem:[%s812] sm:$0x1]
        %v1600 = vld [vmem:[%s820] sm:$0x1]
        %v1601 = vsel %vm972, %v1598, 0.0
        %1602 = vadd.xlane.f32.xlu0 %v1601
        %v1603 = vpop.xlane.xlu0 %1602
        %v1604 = vmul.f32 %v1603, %v976
        %v1605 = vsub.f32 %v1598, %v1604
        %v1606 = vmul.f32 %v1605, %v1605
        %v1607 = vsel %vm972, %v1606, 0.0
        %1608 = vadd.xlane.f32.xlu0 %v1607
        %v1609 = vpop.xlane.xlu0 %1608
        %v1610 = vmul.f32 %v1609, %v976
        %v1611 = vadd.f32 %v1610, 1e-05
        %v1612 = vrsqrt.pop %v1611
        %v1613 = vmul.f32 %v1605, %v1612
        %v1615 = vlaneseq
        %v1616 = vshrl.u32 %v1615, 7
        %v1617 = vsub.s32 0, %v1616
        %v1618 = vrot.slane %v1599, %v1617
        %v1620 = vmul.f32 %v1613, %v1618
        %v1622 = vlaneseq
        %v1623 = vshrl.u32 %v1622, 7
        %v1624 = vsub.s32 0, %v1623
        %v1625 = vrot.slane %v1600, %v1624
        %v1627 = vadd.f32 %v1620, %v1625
        %v1628 = vpack.c.bf16 %v1627, %v1627
        %v1629 = vld [vmem:[%s829] sm:$0xf]
        %v1630 = vld [vmem:[%s829 + $0x4] sm:$0xf]
        %v1631 = vld [vmem:[%s829 + $0x8] sm:$0xf]
        %v1632 = vld [vmem:[%s829 + $0xc] sm:$0xf]
        %v1633 = vld [vmem:[%s837] sm:$0x1]
        %v1635 = vlaneseq
        %v1636 = vshrl.u32 %v1635, 7
        %v1637 = vsub.s32 0, %v1636
        %v1638 = vrot.slane %v1633, %v1637
        %v1644 = vunpack.c.l.b16 %v1629
        %v1645 = vunpack.c.l.b16 %v1630
        %v1646 = vunpack.c.l.b16 %v1631
        %v1647 = vunpack.c.l.b16 %v1632
        %v1648 = vpack.c.b16 %v1645, %v1644
        %v1649 = vpack.c.b16 %v1647, %v1646
        %v1653 = vsel %vm972, %v1628, 0
        %1655 = vmatprep.subr.bf16.mxu0 0
        %1656 = vmatpush1.bf16.msra.mxu0 %v1648
        %1657 = vmatprep.subr.bf16.mxu0 0
        %1658 = vmatpush1.bf16.msra.mxu0 %v1649
        %1659 = vmatprep.subr.bf16.mxu0 0
        %1660 = vmatpush1.bf16.msra.mxu0 0
        %1661 = vmatprep.subr.bf16.mxu0 0
        %1662 = vmatpush1.bf16.msra.mxu0 0
        %1663 = vmatprep.subr.bf16.mxu0 0
        %1664 = vmatpush1.bf16.msra.mxu0 0
        %1665 = vmatprep.subr.bf16.mxu0 0
        %1666 = vmatpush1.bf16.msra.mxu0 0
        %1667 = vmatprep.subr.bf16.mxu0 0
        %1668 = vmatpush1.bf16.msra.mxu0 0
        %1669 = vmatprep.subr.bf16.mxu0 0
        %1670 = vmatpush1.bf16.msra.mxu0 0
        %1671 = vmatprep.subr.bf16.mxu0 0
        %1672 = vmatpush1.bf16.msra.mxu0 0
        %1673 = vmatprep.subr.bf16.mxu0 0
        %1674 = vmatpush1.bf16.msra.mxu0 0
        %1675 = vmatprep.subr.bf16.mxu0 0
        %1676 = vmatpush1.bf16.msra.mxu0 0
        %1677 = vmatprep.subr.bf16.mxu0 0
        %1678 = vmatpush1.bf16.msra.mxu0 0
        %1679 = vmatprep.subr.bf16.mxu0 0
        %1680 = vmatpush1.bf16.msra.mxu0 0
        %1681 = vmatprep.subr.bf16.mxu0 0
        %1682 = vmatpush1.bf16.msra.mxu0 0
        %1683 = vmatprep.subr.bf16.mxu0 0
        %1684 = vmatpush1.bf16.msra.mxu0 0
        %1685 = vmatprep.subr.bf16.mxu0 0
        %1686 = vmatpush1.bf16.msra.mxu0 0
        %1687 = vmatprep.mubr.bf16.mxu0 0
        %1688 = vmatmul.mubr.bf16.gmra.mrb[0].mxu0 %v1653
        %v1689 = vpop.f32.mrb[0].mxu0
        %v1690 = vadd.f32 %v1638, %v1689
        %v1691 = vpop.f32.mrb[0].mxu0
        %v1692 = vpop.f32.mrb[0].mxu0
        %v1693 = vpop.f32.mrb[0].mxu0
        %1694 = vdwg.mxu0
        %v1695 = vmul.f32 %v1690, 0.5
        %v1696 = vmul.f32 %v1690, 0.70710677
        %vm1697 = vcmp.ge.f32.partialorder %v1696, 0.0
        %v1698 = vsel %vm1697, 1.0, -1.0
        %v1699 = vand.u32 2147483647, %v1696
        %v1700 = vmul.f32 %v1699, 0.3275911
        %v1701 = vadd.f32 %v1700, 1.0
        %v1702 = vrcp.pop %v1701
        %v1703 = vmul.f32 1.0, %v1702
        %v1704 = vmul.f32 %v1703, 1.0614054
        %v1705 = vadd.f32 %v1704, -1.4531521
        %v1706 = vmul.f32 %v1705, %v1703
        %v1707 = vadd.f32 %v1706, 1.4214138
        %v1708 = vmul.f32 %v1707, %v1703
        %v1709 = vadd.f32 %v1708, -0.28449672
        %v1710 = vmul.f32 %v1709, %v1703
        %v1711 = vadd.f32 %v1710, 0.2548296
        %v1712 = vmul.f32 %v1711, %v1703
        %v1713 = vsub.f32 0.0, %v1699
        %v1714 = vmul.f32 %v1713, %v1699
        %v1715 = vmul.f32 %v1714, 1.442695
        %v1716 = vpow.pop %v1715
        %v1717 = vmul.f32 %v1712, %v1716
        %v1718 = vsub.f32 1.0, %v1717
        %v1719 = vmul.f32 %v1698, %v1718
        %v1720 = vadd.f32 %v1719, 1.0
        %v1721 = vmul.f32 %v1695, %v1720
        %v1722 = vpack.c.bf16 %v1721, %v1721
        %v1723 = vld [vmem:[%s846] sm:$0xf]
        %v1724 = vld [vmem:[%s846 + $0x4] sm:$0xf]
        %v1725 = vld [vmem:[%s846 + $0x8] sm:$0xf]
        %v1726 = vld [vmem:[%s846 + $0xc] sm:$0xf]
        %v1727 = vld [vmem:[%s846 + $0x10] sm:$0xf]
        %v1728 = vld [vmem:[%s846 + $0x14] sm:$0xf]
        %v1729 = vld [vmem:[%s846 + $0x18] sm:$0xf]
        %v1730 = vld [vmem:[%s846 + $0x1c] sm:$0xf]
        %v1731 = vld [vmem:[%s846 + $0x20] sm:$0xf]
        %v1732 = vld [vmem:[%s846 + $0x24] sm:$0xf]
        %v1733 = vld [vmem:[%s846 + $0x28] sm:$0xf]
        %v1734 = vld [vmem:[%s846 + $0x2c] sm:$0xf]
        %v1735 = vld [vmem:[%s846 + $0x30] sm:$0xf]
        %v1736 = vld [vmem:[%s846 + $0x34] sm:$0xf]
        %v1737 = vld [vmem:[%s846 + $0x38] sm:$0xf]
        %v1738 = vld [vmem:[%s846 + $0x3c] sm:$0xf]
        %v1739 = vld [vmem:[%s854] sm:$0x1]
        %v1741 = vlaneseq
        %v1742 = vshrl.u32 %v1741, 7
        %v1743 = vsub.s32 0, %v1742
        %v1744 = vrot.slane %v1739, %v1743
        %v1762 = vunpack.c.l.b16 %v1723
        %v1763 = vunpack.c.l.b16 %v1724
        %v1764 = vunpack.c.l.b16 %v1725
        %v1765 = vunpack.c.l.b16 %v1726
        %v1766 = vunpack.c.l.b16 %v1727
        %v1767 = vunpack.c.l.b16 %v1728
        %v1768 = vunpack.c.l.b16 %v1729
        %v1769 = vunpack.c.l.b16 %v1730
        %v1770 = vunpack.c.l.b16 %v1731
        %v1771 = vunpack.c.l.b16 %v1732
        %v1772 = vunpack.c.l.b16 %v1733
        %v1773 = vunpack.c.l.b16 %v1734
        %v1774 = vunpack.c.l.b16 %v1735
        %v1775 = vunpack.c.l.b16 %v1736
        %v1776 = vunpack.c.l.b16 %v1737
        %v1777 = vunpack.c.l.b16 %v1738
        %v1778 = vpack.c.b16 %v1763, %v1762
        %v1779 = vpack.c.b16 %v1765, %v1764
        %v1780 = vpack.c.b16 %v1767, %v1766
        %v1781 = vpack.c.b16 %v1769, %v1768
        %v1782 = vpack.c.b16 %v1771, %v1770
        %v1783 = vpack.c.b16 %v1773, %v1772
        %v1784 = vpack.c.b16 %v1775, %v1774
        %v1785 = vpack.c.b16 %v1777, %v1776
        %1794 = vmatprep.subr.bf16.mxu0 0
        %1795 = vmatpush1.bf16.msra.mxu0 %v1778
        %1796 = vmatprep.subr.bf16.mxu0 0
        %1797 = vmatpush1.bf16.msra.mxu0 %v1779
        %1798 = vmatprep.subr.bf16.mxu0 0
        %1799 = vmatpush1.bf16.msra.mxu0 %v1780
        %1800 = vmatprep.subr.bf16.mxu0 0
        %1801 = vmatpush1.bf16.msra.mxu0 %v1781
        %1802 = vmatprep.subr.bf16.mxu0 0
        %1803 = vmatpush1.bf16.msra.mxu0 %v1782
        %1804 = vmatprep.subr.bf16.mxu0 0
        %1805 = vmatpush1.bf16.msra.mxu0 %v1783
        %1806 = vmatprep.subr.bf16.mxu0 0
        %1807 = vmatpush1.bf16.msra.mxu0 %v1784
        %1808 = vmatprep.subr.bf16.mxu0 0
        %1809 = vmatpush1.bf16.msra.mxu0 %v1785
        %1810 = vmatprep.subr.bf16.mxu0 0
        %1811 = vmatpush1.bf16.msra.mxu0 0
        %1812 = vmatprep.subr.bf16.mxu0 0
        %1813 = vmatpush1.bf16.msra.mxu0 0
        %1814 = vmatprep.subr.bf16.mxu0 0
        %1815 = vmatpush1.bf16.msra.mxu0 0
        %1816 = vmatprep.subr.bf16.mxu0 0
        %1817 = vmatpush1.bf16.msra.mxu0 0
        %1818 = vmatprep.subr.bf16.mxu0 0
        %1819 = vmatpush1.bf16.msra.mxu0 0
        %1820 = vmatprep.subr.bf16.mxu0 0
        %1821 = vmatpush1.bf16.msra.mxu0 0
        %1822 = vmatprep.subr.bf16.mxu0 0
        %1823 = vmatpush1.bf16.msra.mxu0 0
        %1824 = vmatprep.subr.bf16.mxu0 0
        %1825 = vmatpush1.bf16.msra.mxu0 0
        %1826 = vmatprep.mubr.bf16.mxu0 0
        %1827 = vmatmul.mubr.bf16.gmra.mrb[0].mxu0 %v1722
        %v1828 = vpop.f32.mrb[0].mxu0
        %v1829 = vadd.f32 %v1744, %v1828
        %v1830 = vpop.f32.mrb[0].mxu0
        %v1831 = vpop.f32.mrb[0].mxu0
        %v1832 = vpop.f32.mrb[0].mxu0
        %1833 = vdwg.mxu0
        %v1834 = vadd.f32 %v1598, %v1829
        %1835 = vst.msk [vmem:[#allocation2] sm:$0xff] %vm972, %v1834
        %p1836 = scmp.eq.s32.totalorder %s56, 1
        // Predicated region
        $region145: #{tpu_custom_call.1} parent=79 // pred_check
          %p1837 = pneg %p1836
        $region146: #{tpu_custom_call.1} parent=79 // pred_check_branch
          %1839 = sbr.rel (%p1837) target = $region148
        $region147: #{tpu_custom_call.1} parent=79 // pred_region
          %v1840 = vld [vmem:[#allocation24] sm:$0x1]
          %v1841 = vld [vmem:[#allocation26] sm:$0x1]
          %v1842 = vsel %vm972, %v1834, 0.0
          %1843 = vadd.xlane.f32.xlu0 %v1842
          %v1844 = vpop.xlane.xlu0 %1843
          %v1845 = vmul.f32 %v1844, %v976
          %v1846 = vsub.f32 %v1834, %v1845
          %v1847 = vmul.f32 %v1846, %v1846
          %v1848 = vsel %vm972, %v1847, 0.0
          %1849 = vadd.xlane.f32.xlu0 %v1848
          %v1850 = vpop.xlane.xlu0 %1849
          %v1851 = vmul.f32 %v1850, %v976
          %v1852 = vadd.f32 %v1851, 1e-05
          %v1853 = vrsqrt.pop %v1852
          %v1854 = vmul.f32 %v1846, %v1853
          %v1856 = vlaneseq
          %v1857 = vshrl.u32 %v1856, 7
          %v1858 = vsub.s32 0, %v1857
          %v1859 = vrot.slane %v1840, %v1858
          %v1861 = vmul.f32 %v1854, %v1859
          %v1863 = vlaneseq
          %v1864 = vshrl.u32 %v1863, 7
          %v1865 = vsub.s32 0, %v1864
          %v1866 = vrot.slane %v1841, %v1865
          %v1868 = vadd.f32 %v1861, %v1866
          %1869 = vst.msk [vmem:[%s960] sm:$0xff] %vm972, %v1868
        $region148: #{tpu_custom_call.1} parent=79 // pred_fallthru
          _
        %s1870 = sand.u32 %s451, 1
        %s1871 = scalar_lea.sflag [#allocation5], %s1870
        %s1872 = sand.u32 %s451, 1
        %s1873 = smul.addr %s1872, 8
        %s1874 = scalar_lea.vmem [#allocation27], %s1873
        // Predicated region
        $region149: #{tpu_custom_call.1} parent=79 // pred_check
          %p1875 = pneg %p461
        $region150: #{tpu_custom_call.1} parent=79 // pred_check_branch
          %1877 = sbr.rel (%p1875) target = $region152
        $region151: #{tpu_custom_call.1} parent=79 // pred_region
          %s1879 = ssub.s32 128, 128
          %1880 = vsyncadd %s1871, %s1879
          %s1881 = smul.addr %s55, 128
          %s1882 = scalar_lea.hbm %s15, %s1881
          %s1884 = sshll.u32 %s1874, 4
          %s1885 = int_to_ptr.vmem [resolvable:$true] %s1884
          %1887 = dma.vmem_to_hbm [thread:$0]  %s1885, 128, %s1882, %s1871
        $region152: #{tpu_custom_call.1} parent=79 // pred_fallthru
          _
      $region80: #{tpu_custom_call.1} parent=5 // pred_fallthru
        _
      %p1888 = scmp.le.s32.totalorder 2, %s46
      // Predicated region
      $region153: #{tpu_custom_call.1} parent=5 // pred_check
        %p1889 = pneg %p1888
      $region154: #{tpu_custom_call.1} parent=5 // pred_check_branch
        %1891 = sbr.rel (%p1889) target = $region156
      $region155: #{tpu_custom_call.1} parent=5 // pred_region
        %s1892 = ssub.s32 %s46, 2
        // Predicated region
        $region157: #{tpu_custom_call.1} parent=155 // pred_check
          %p1893 = pneg %p467
        $region158: #{tpu_custom_call.1} parent=155 // pred_check_branch
          %1895 = sbr.rel (%p1893) target = $region160
        $region159: #{tpu_custom_call.1} parent=155 // pred_region
          %s1896 = sand.u32 %s452, 1
          %s1897 = scalar_lea.sflag [#allocation5], %s1896
          %s1898 = sand.u32 %s452, 1
          %s1899 = smul.addr %s1898, 8
          %s1900 = scalar_lea.vmem [#allocation27], %s1899
          %1901 = dma.done %s1897, 128
        $region160: #{tpu_custom_call.1} parent=155 // pred_fallthru
          _
      $region156: #{tpu_custom_call.1} parent=5 // pred_fallthru
        _
    $region6: #{tpu_custom_call.1} parent=1 // loop_footer
      %s50 = sadd.s32 1, %s46
    $region7: #{tpu_custom_call.1} parent=1 // loop_footer_branch
      %45 = sbr.rel target = $region3
    $region8: #{tpu_custom_call.1} parent=1 // loop_exit
      _
    %1902 = vsyncpa [#allocation4], 1
    %s1903 = scalar_lea.sflag [#allocation4], 1
    %1904 = vsyncpa %s1903, 1
    %1905 = vsyncpa [#allocation7], 1
    %s1906 = scalar_lea.sflag [#allocation7], 1
    %1907 = vsyncpa %s1906, 1
    %1908 = vsyncpa [#allocation10], 1
    %s1909 = scalar_lea.sflag [#allocation10], 1
    %1910 = vsyncpa %s1909, 1
    %1911 = vsyncpa [#allocation13], 1
    %s1912 = scalar_lea.sflag [#allocation13], 1
    %1913 = vsyncpa %s1912, 1
    %1914 = vsyncpa [#allocation16], 1
    %s1915 = scalar_lea.sflag [#allocation16], 1
    %1916 = vsyncpa %s1915, 1
    %1917 = vsyncpa [#allocation19], 1
    %s1918 = scalar_lea.sflag [#allocation19], 1
    %1919 = vsyncpa %s1918, 1
    %1920 = vsyncpa [#allocation22], 1
    %s1921 = scalar_lea.sflag [#allocation22], 1
    %1922 = vsyncpa %s1921, 1
    %1923 = vsyncpa [#allocation25], 1
    %1924 = vsyncpa [#allocation5], 1
    %s1925 = scalar_lea.sflag [#allocation5], 1
    %1926 = vsyncpa %s1925, 1

</llo_original>
